<compile_context>
chip_gen: v7x
topology: tpu7x:2x2x1
jax: 0.10.0
libtpu: 0.0.40
codegen_flags: <defaults>
</compile_context>

<pallas_src>
import jax
import jax.numpy as jnp
from jax import lax
from jax.experimental import pallas as pl
from jax.experimental.pallas import tpu as pltpu


def _make_kernel(depth, use_vpu_gapply):
    def kernel(x_ref, g_ref, win_ref, bin_ref, w1_ref, b1_ref,
               w2_ref, b2_ref, wout_ref, bout_ref, o_ref):
        # x_ref:   (B, Mp, Cp)  compute_dtype   g_ref: (B, 1, Mp, Mp) f32
        # win_ref: (1, Cp, Hp)                  bin_ref: (1, 1, Hp) f32
        # w1_ref:  (1, D, Hp, Hp)               b1_ref:  (1, D, 1, Hp)  (same w2/b2)
        # wout_ref:(1, Hp, Pp)                  bout_ref:(1, 1, Pp)
        # o_ref:   (B, 1, Mp, Pp)
        B, Mp, Cp = x_ref.shape
        Pp = o_ref.shape[-1]
        wdtype = win_ref.dtype

        def mm(a, w):
            # matmul operands in weight dtype (f32 or bf16); accumulate f32
            return jnp.dot(a.astype(wdtype), w, preferred_element_type=jnp.float32)

        x = x_ref[...].reshape(B * Mp, Cp)                       # no-op cast below
        h = mm(x, win_ref[0]) + bin_ref[0]                       # (B*Mp, Hp) f32

        def res_block(d, h):
            t = jnp.maximum(mm(h, w1_ref[0, d]) + b1_ref[0, d], 0.0)
            return h + mm(t, w2_ref[0, d]) + b2_ref[0, d]

        if depth > 0:
            if depth <= 4:                                       # small: unroll
                for d in range(depth):
                    h = res_block(d, h)
            else:                                                # deep: bounded live ranges
                h = lax.fori_loop(0, depth, res_block, h)

        y = (mm(h, wout_ref[0]) + bout_ref[0]).reshape(B, Mp, Pp)   # f32
        g = g_ref[:, 0]                                              # (B, Mp, Mp) f32

        if use_vpu_gapply:
            # Small M: broadcast multiply-accumulate on the VPU (f32); avoids
            # B near-empty MXU passes with K=M<<128.
            out = g[:, :, 0:1] * y[:, 0:1, :]
            for j in range(1, Mp):
                out = out + g[:, :, j:j + 1] * y[:, j:j + 1, :]
        else:
            out = jnp.einsum('bij,bjp->bip', g.astype(wdtype), y.astype(wdtype),
                             preferred_element_type=jnp.float32)
        o_ref[:, 0] = jnp.maximum(out, 0.0).astype(o_ref.dtype)     # ReLU
    return kernel


def _pad(a, targets):
    """Zero-pad selected axes of `a` up to target sizes (no-op if already big enough)."""
    widths = [(0, 0)] * a.ndim
    changed = False
    for ax, tgt in targets.items():
        cur = a.shape[ax]
        if tgt > cur:
            widths[ax] = (0, tgt - cur)
            changed = True
    return jnp.pad(a, widths) if changed else a


def graph_mat_res_layer(G, x, params, *, compute_dtype=jnp.bfloat16,
                        out_dtype=jnp.float32, batch_block=None):
    """Pallas forward: G (N,GS,M,M), x (N,M,C) -> (N,GS,M,P)."""
    w_in, b_in, w1, b1, w2, b2, w_out, b_out = params
    N, GS, M, _ = G.shape
    C = x.shape[-1]
    H = w_in.shape[-1]
    D = w1.shape[1]
    P = w_out.shape[-1]

    # ---- pad feature dims to TPU-friendly sizes (zero padding is exact) ----
    LANE, SUB = 128, 8
    Mp = M + (-M) % SUB
    Cp = C + (-C) % LANE
    Hp = H + (-H) % LANE
    Pp = P + (-P) % LANE

    wbytes = jnp.dtype(compute_dtype).itemsize
    xbytes = wbytes
    obytes = jnp.dtype(out_dtype).itemsize

    # ---- generation-aware VMEM budget ----
    try:
        vmem_cap = int(pltpu.get_tpu_info().vmem_capacity_bytes)
    except Exception:
        vmem_cap = 64 * 1024 * 1024          # v7x-safe fallback
    vmem_limit = int(0.85 * vmem_cap)        # headroom for compiler scratch
    row_cap = 2048 if vmem_cap >= 96 * 1024 * 1024 else 1024

    # Resident set: single-buffered weights (Buffered(1)) + double-buffered
    # x/G/out blocks + live f32 intermediates.
    weight_bytes = ((Cp * Hp + 2 * D * Hp * Hp + Hp * Pp) * wbytes
                    + (Hp + 2 * D * Hp + Pp) * 4)

    def _fits(b):
        rows = b * Mp
        io = 2 * rows * (Cp * xbytes + Mp * 4 + Pp * obytes)
        interm = rows * (4 * Hp + 2 * Pp) * 4
        return weight_bytes + io + interm <= vmem_limit

    # ---- batch-block selection: tall row blocks, pad N if it does not divide ----
    if batch_block is None:
        b_hi = max(1, min(N, max(1, row_cap // Mp)))
        B = 1
        for b in range(b_hi, 0, -1):
            if _fits(b):
                B = b
                break
        nb_steps = -(-N // B)
        B = -(-N // nb_steps)        # same step count, minimal batch padding
    else:
        B = max(1, int(batch_block))
    NB = -(-N // B)
    Npad = NB * B

    # ---- pad arrays (padded batch rows have zero G -> zero output, sliced off) ----
    xp = _pad(x, {0: Npad, 1: Mp, 2: Cp}).astype(compute_dtype)
    Gp = _pad(G, {0: Npad, 2: Mp, 3: Mp})                 # G stays f32
    w_in_p = _pad(w_in, {1: Cp, 2: Hp}).astype(compute_dtype)
    b_in_p = _pad(b_in, {2: Hp})                          # biases stay f32
    w1_p = _pad(w1, {2: Hp, 3: Hp}).astype(compute_dtype)
    b1_p = _pad(b1, {3: Hp})
    w2_p = _pad(w2, {2: Hp, 3: Hp}).astype(compute_dtype)
    b2_p = _pad(b2, {3: Hp})
    w_out_p = _pad(w_out, {1: Hp, 2: Pp}).astype(compute_dtype)
    b_out_p = _pad(b_out, {2: Pp})

    # ---- advisory cost estimate for the surrounding XLA schedule ----
    flops = int(Npad * GS * (2 * Mp * Cp * Hp + 4 * D * Mp * Hp * Hp
                             + 2 * Mp * Hp * Pp + 2 * Mp * Mp * Pp))
    in_arrays = (xp, Gp, w_in_p, b_in_p, w1_p, b1_p, w2_p, b2_p, w_out_p, b_out_p)
    bytes_accessed = int(sum(int(a.size) * a.dtype.itemsize for a in in_arrays)
                         + (GS - 1) * int(xp.size) * xp.dtype.itemsize  # x re-streamed per channel
                         + Npad * GS * Mp * Pp * obytes)
    cost = pl.CostEstimate(flops=flops, transcendentals=0,
                           bytes_accessed=bytes_accessed)

    # Megacore: split the GS axis (disjoint weight sets per core); if GS == 1,
    # fall back to sharding the batch axis.
    if GS > 1:
        dims = ("parallel", "arbitrary")
    else:
        dims = ("arbitrary", "parallel")

    # Per-channel weights only change on the outer g axis -> single buffer.
    wmode = pl.Buffered(1)

    out_padded = pl.pallas_call(
        _make_kernel(D, Mp < 64),
        out_shape=jax.ShapeDtypeStruct((Npad, GS, Mp, Pp), out_dtype),
        grid_spec=pltpu.PrefetchScalarGridSpec(
            num_scalar_prefetch=0,
            # GS outer / batch inner: per-channel weights stay resident in VMEM
            # across the whole inner batch sweep.
            grid=(GS, NB),
            in_specs=[
                pl.BlockSpec((B, Mp, Cp), lambda g, nb: (nb, 0, 0)),          # x
                pl.BlockSpec((B, 1, Mp, Mp), lambda g, nb: (nb, g, 0, 0)),    # G
                pl.BlockSpec((1, Cp, Hp), lambda g, nb: (g, 0, 0),
                             pipeline_mode=wmode),                           # w_in
                pl.BlockSpec((1, 1, Hp), lambda g, nb: (g, 0, 0),
                             pipeline_mode=wmode),                           # b_in
                pl.BlockSpec((1, D, Hp, Hp), lambda g, nb: (g, 0, 0, 0),
                             pipeline_mode=wmode),                           # w1
                pl.BlockSpec((1, D, 1, Hp), lambda g, nb: (g, 0, 0, 0),
                             pipeline_mode=wmode),                           # b1
                pl.BlockSpec((1, D, Hp, Hp), lambda g, nb: (g, 0, 0, 0),
                             pipeline_mode=wmode),                           # w2
                pl.BlockSpec((1, D, 1, Hp), lambda g, nb: (g, 0, 0, 0),
                             pipeline_mode=wmode),                           # b2
                pl.BlockSpec((1, Hp, Pp), lambda g, nb: (g, 0, 0),
                             pipeline_mode=wmode),                           # w_out
                pl.BlockSpec((1, 1, Pp), lambda g, nb: (g, 0, 0),
                             pipeline_mode=wmode),                           # b_out
            ],
            out_specs=pl.BlockSpec((B, 1, Mp, Pp), lambda g, nb: (nb, g, 0, 0)),
        ),
        compiler_params=pltpu.CompilerParams(
            dimension_semantics=dims,
            vmem_limit_bytes=vmem_limit),
        cost_estimate=cost,
    )(xp, Gp, w_in_p, b_in_p, w1_p, b1_p, w2_p, b2_p, w_out_p, b_out_p)

    return out_padded[:N, :, :M, :P]


def reference(G, x, params):
    """Pure-JAX reference mirroring the PyTorch forward semantics."""
    w_in, b_in, w1, b1, w2, b2, w_out, b_out = params
    GS, D = w1.shape[0], w1.shape[1]
    N, M, C = x.shape
    ys = []
    for g in range(GS):
        h = x.reshape(-1, C) @ w_in[g] + b_in[g]
        for d in range(D):
            t = jnp.maximum(h @ w1[g, d] + b1[g, d], 0.0)
            h = h + t @ w2[g, d] + b2[g, d]
        y = (h @ w_out[g] + b_out[g]).reshape(N, M, -1)
        ys.append(y)
    multi_x = jnp.stack(ys)                        # (GS, N, M, P)
    xout = jnp.stack(
        [jnp.einsum('gij,gjp->gip', G[n], multi_x[:, n]) for n in range(N)])
    return jnp.maximum(xout, 0.0)                  # (N, GS, M, P)


def init_params(key, C, H, P, GS, depth, init_std):
    ks = jax.random.split(key, 8)
    w_in = jax.random.normal(ks[0], (GS, C, H), jnp.float32) * init_std
    b_in = jax.random.normal(ks[1], (GS, 1, H), jnp.float32) * init_std
    w1 = jax.random.normal(ks[2], (GS, depth, H, H), jnp.float32) * init_std
    b1 = jax.random.normal(ks[3], (GS, depth, 1, H), jnp.float32) * init_std
    w2 = jax.random.normal(ks[4], (GS, depth, H, H), jnp.float32) * init_std
    b2 = jax.random.normal(ks[5], (GS, depth, 1, H), jnp.float32) * init_std
    w_out = jax.random.normal(ks[6], (GS, H, P), jnp.float32) * init_std
    b_out = jax.random.normal(ks[7], (GS, 1, P), jnp.float32) * init_std
    return (w_in, b_in, w1, b1, w2, b2, w_out, b_out)


if __name__ == "__main__":
    key = jax.random.PRNGKey(0)

    # ---- Test 1: N=2, M=8, C=4, GS=2, hidden=32, res_depth=2, P=8 ----
    N, M, C, GS, H, DEPTH, P = 2, 8, 4, 2, 32, 2, 8
    k_g, k_x, k_p, key = jax.random.split(key, 4)
    G = jax.random.uniform(k_g, (N, GS, M, M), jnp.float32)
    x = jax.random.normal(k_x, (N, M, C), jnp.float32)
    params = init_params(k_p, C, H, P, GS, DEPTH, init_std=0.1)
    ref = reference(G, x, params)

    # exact f32 path
    out = graph_mat_res_layer(G, x, params, compute_dtype=jnp.float32)
    out = jax.block_until_ready(out)
    assert out.shape == (N, GS, M, P)
    assert jnp.allclose(out, ref, atol=1e-5, rtol=1e-5), "f32 mismatch vs reference"

    # default bf16 path (bf16 matmul operands, f32 accumulation / elementwise)
    out_bf16 = graph_mat_res_layer(G, x, params)
    out_bf16 = jax.block_until_ready(out_bf16)
    assert out_bf16.shape == (N, GS, M, P)
    assert jnp.allclose(out_bf16, ref, atol=5e-2, rtol=5e-2), "bf16 mismatch vs reference"

    # ---- Test 2: non-dividing batch (padding path) + deep ResNet (fori_loop) ----
    N2, M2, C2, GS2, H2, DEPTH2, P2 = 3, 16, 4, 1, 32, 5, 8
    k_g, k_x, k_p, key = jax.random.split(key, 4)
    G2 = jax.random.uniform(k_g, (N2, GS2, M2, M2), jnp.float32)
    x2 = jax.random.normal(k_x, (N2, M2, C2), jnp.float32)
    params2 = init_params(k_p, C2, H2, P2, GS2, DEPTH2, init_std=0.1)
    ref2 = reference(G2, x2, params2)

    out2 = graph_mat_res_layer(G2, x2, params2, compute_dtype=jnp.float32,
                               batch_block=2)   # Npad=4, NB=2 -> exercises padding
    out2 = jax.block_until_ready(out2)
    assert out2.shape == (N2, GS2, M2, P2)
    assert jnp.allclose(out2, ref2, atol=1e-5, rtol=1e-5), "padded-batch mismatch vs reference"

    print("KERNEL_OK")
</pallas_src>

<mosaic_0001>
module attributes {stable_mosaic.version = 11 : i64} {
  func.func @kernel(%arg0: i32, %arg1: i32, %arg2: memref<2x8x128xf32, #tpu.memory_space<vmem>>, %arg3: memref<2x1x8x8xf32, #tpu.memory_space<vmem>>, %arg4: memref<1x128x128xf32, #tpu.memory_space<vmem>>, %arg5: memref<1x1x128xf32, #tpu.memory_space<vmem>>, %arg6: memref<1x2x128x128xf32, #tpu.memory_space<vmem>>, %arg7: memref<1x2x1x128xf32, #tpu.memory_space<vmem>>, %arg8: memref<1x2x128x128xf32, #tpu.memory_space<vmem>>, %arg9: memref<1x2x1x128xf32, #tpu.memory_space<vmem>>, %arg10: memref<1x128x128xf32, #tpu.memory_space<vmem>>, %arg11: memref<1x1x128xf32, #tpu.memory_space<vmem>>, %arg12: memref<2x1x8x128xf32, #tpu.memory_space<vmem>>) attributes {dimension_semantics = [#tpu.dimension_semantics<parallel>, #tpu.dimension_semantics<arbitrary>], iteration_bounds = array<i64: 2, 1>, scalar_prefetch = 0 : i64, scratch_operands = 0 : i64, tpu.core_type = #tpu.core_type<tc>, window_params = [{transform_indices = @transform_0, window_bounds = array<i64: 2, 8, 128>}, {transform_indices = @transform_1, window_bounds = array<i64: 2, 1, 8, 8>}, {pipeline_mode = #tpu.pipeline_mode<synchronous>, transform_indices = @transform_2, window_bounds = array<i64: 1, 128, 128>}, {pipeline_mode = #tpu.pipeline_mode<synchronous>, transform_indices = @transform_3, window_bounds = array<i64: 1, 1, 128>}, {pipeline_mode = #tpu.pipeline_mode<synchronous>, transform_indices = @transform_4, window_bounds = array<i64: 1, 2, 128, 128>}, {pipeline_mode = #tpu.pipeline_mode<synchronous>, transform_indices = @transform_5, window_bounds = array<i64: 1, 2, 1, 128>}, {pipeline_mode = #tpu.pipeline_mode<synchronous>, transform_indices = @transform_6, window_bounds = array<i64: 1, 2, 128, 128>}, {pipeline_mode = #tpu.pipeline_mode<synchronous>, transform_indices = @transform_7, window_bounds = array<i64: 1, 2, 1, 128>}, {pipeline_mode = #tpu.pipeline_mode<synchronous>, transform_indices = @transform_8, window_bounds = array<i64: 1, 128, 128>}, {pipeline_mode = #tpu.pipeline_mode<synchronous>, transform_indices = @transform_9, window_bounds = array<i64: 1, 1, 128>}, {transform_indices = @transform_10, window_bounds = array<i64: 2, 1, 8, 128>}]} {
    %c0 = arith.constant 0 : index
    %c0_0 = arith.constant 0 : index
    %c0_1 = arith.constant 0 : index
    %0 = vector.load %arg2[%c0, %c0_0, %c0_1] : memref<2x8x128xf32, #tpu.memory_space<vmem>>, vector<2x8x128xf32>
    %1 = vector.shape_cast %0 : vector<2x8x128xf32> to vector<16x128xf32>
    %c0_2 = arith.constant 0 : index
    %c0_3 = arith.constant 0 : index
    %c0_4 = arith.constant 0 : index
    %2 = vector.load %arg4[%c0_2, %c0_3, %c0_4] : memref<1x128x128xf32, #tpu.memory_space<vmem>>, vector<1x128x128xf32>
    %3 = vector.shape_cast %2 : vector<1x128x128xf32> to vector<128x128xf32>
    %cst = arith.constant dense<0.000000e+00> : vector<16x128xf32>
    %4 = tpu.matmul %1, %3, %cst {dimension_numbers = #tpu.dot_dimension_numbers<[1], [0], [0], [1], [0, 0, 1, 1], [], []>} : vector<16x128xf32>, vector<128x128xf32>, vector<16x128xf32> -> vector<16x128xf32>
    %c0_5 = arith.constant 0 : index
    %c0_6 = arith.constant 0 : index
    %c0_7 = arith.constant 0 : index
    %5 = vector.load %arg5[%c0_5, %c0_6, %c0_7] : memref<1x1x128xf32, #tpu.memory_space<vmem>>, vector<1x1x128xf32>
    %6 = vector.shape_cast %5 : vector<1x1x128xf32> to vector<1x128xf32>
    %7 = vector.broadcast %6 : vector<1x128xf32> to vector<16x128xf32>
    %8 = arith.addf %4, %7 : vector<16x128xf32>
    %c0_8 = arith.constant 0 : index
    %c0_9 = arith.constant 0 : index
    %c0_10 = arith.constant 0 : index
    %c0_11 = arith.constant 0 : index
    %9 = vector.load %arg6[%c0_8, %c0_9, %c0_10, %c0_11] : memref<1x2x128x128xf32, #tpu.memory_space<vmem>>, vector<1x1x128x128xf32>
    %10 = vector.shape_cast %9 : vector<1x1x128x128xf32> to vector<128x128xf32>
    %cst_12 = arith.constant dense<0.000000e+00> : vector<16x128xf32>
    %11 = tpu.matmul %8, %10, %cst_12 {dimension_numbers = #tpu.dot_dimension_numbers<[1], [0], [0], [1], [0, 0, 1, 1], [], []>} : vector<16x128xf32>, vector<128x128xf32>, vector<16x128xf32> -> vector<16x128xf32>
    %c0_13 = arith.constant 0 : index
    %c0_14 = arith.constant 0 : index
    %c0_15 = arith.constant 0 : index
    %c0_16 = arith.constant 0 : index
    %12 = vector.load %arg7[%c0_13, %c0_14, %c0_15, %c0_16] : memref<1x2x1x128xf32, #tpu.memory_space<vmem>>, vector<1x1x1x128xf32>
    %13 = vector.shape_cast %12 : vector<1x1x1x128xf32> to vector<1x128xf32>
    %14 = vector.broadcast %13 : vector<1x128xf32> to vector<16x128xf32>
    %15 = arith.addf %11, %14 : vector<16x128xf32>
    %cst_17 = arith.constant 0.000000e+00 : f32
    %16 = vector.broadcast %cst_17 : f32 to vector<16x128xf32>
    %17 = arith.maximumf %15, %16 : vector<16x128xf32>
    %c0_18 = arith.constant 0 : index
    %c0_19 = arith.constant 0 : index
    %c0_20 = arith.constant 0 : index
    %c0_21 = arith.constant 0 : index
    %18 = vector.load %arg8[%c0_18, %c0_19, %c0_20, %c0_21] : memref<1x2x128x128xf32, #tpu.memory_space<vmem>>, vector<1x1x128x128xf32>
    %19 = vector.shape_cast %18 : vector<1x1x128x128xf32> to vector<128x128xf32>
    %cst_22 = arith.constant dense<0.000000e+00> : vector<16x128xf32>
    %20 = tpu.matmul %17, %19, %cst_22 {dimension_numbers = #tpu.dot_dimension_numbers<[1], [0], [0], [1], [0, 0, 1, 1], [], []>} : vector<16x128xf32>, vector<128x128xf32>, vector<16x128xf32> -> vector<16x128xf32>
    %21 = arith.addf %8, %20 : vector<16x128xf32>
    %c0_23 = arith.constant 0 : index
    %c0_24 = arith.constant 0 : index
    %c0_25 = arith.constant 0 : index
    %c0_26 = arith.constant 0 : index
    %22 = vector.load %arg9[%c0_23, %c0_24, %c0_25, %c0_26] : memref<1x2x1x128xf32, #tpu.memory_space<vmem>>, vector<1x1x1x128xf32>
    %23 = vector.shape_cast %22 : vector<1x1x1x128xf32> to vector<1x128xf32>
    %24 = vector.broadcast %23 : vector<1x128xf32> to vector<16x128xf32>
    %25 = arith.addf %21, %24 : vector<16x128xf32>
    %c0_27 = arith.constant 0 : index
    %c1 = arith.constant 1 : index
    %c0_28 = arith.constant 0 : index
    %c0_29 = arith.constant 0 : index
    %26 = vector.load %arg6[%c0_27, %c1, %c0_28, %c0_29] : memref<1x2x128x128xf32, #tpu.memory_space<vmem>>, vector<1x1x128x128xf32>
    %27 = vector.shape_cast %26 : vector<1x1x128x128xf32> to vector<128x128xf32>
    %cst_30 = arith.constant dense<0.000000e+00> : vector<16x128xf32>
    %28 = tpu.matmul %25, %27, %cst_30 {dimension_numbers = #tpu.dot_dimension_numbers<[1], [0], [0], [1], [0, 0, 1, 1], [], []>} : vector<16x128xf32>, vector<128x128xf32>, vector<16x128xf32> -> vector<16x128xf32>
    %c0_31 = arith.constant 0 : index
    %c1_32 = arith.constant 1 : index
    %c0_33 = arith.constant 0 : index
    %c0_34 = arith.constant 0 : index
    %29 = vector.load %arg7[%c0_31, %c1_32, %c0_33, %c0_34] : memref<1x2x1x128xf32, #tpu.memory_space<vmem>>, vector<1x1x1x128xf32>
    %30 = vector.shape_cast %29 : vector<1x1x1x128xf32> to vector<1x128xf32>
    %31 = vector.broadcast %30 : vector<1x128xf32> to vector<16x128xf32>
    %32 = arith.addf %28, %31 : vector<16x128xf32>
    %cst_35 = arith.constant 0.000000e+00 : f32
    %33 = vector.broadcast %cst_35 : f32 to vector<16x128xf32>
    %34 = arith.maximumf %32, %33 : vector<16x128xf32>
    %c0_36 = arith.constant 0 : index
    %c1_37 = arith.constant 1 : index
    %c0_38 = arith.constant 0 : index
    %c0_39 = arith.constant 0 : index
    %35 = vector.load %arg8[%c0_36, %c1_37, %c0_38, %c0_39] : memref<1x2x128x128xf32, #tpu.memory_space<vmem>>, vector<1x1x128x128xf32>
    %36 = vector.shape_cast %35 : vector<1x1x128x128xf32> to vector<128x128xf32>
    %cst_40 = arith.constant dense<0.000000e+00> : vector<16x128xf32>
    %37 = tpu.matmul %34, %36, %cst_40 {dimension_numbers = #tpu.dot_dimension_numbers<[1], [0], [0], [1], [0, 0, 1, 1], [], []>} : vector<16x128xf32>, vector<128x128xf32>, vector<16x128xf32> -> vector<16x128xf32>
    %38 = arith.addf %25, %37 : vector<16x128xf32>
    %c0_41 = arith.constant 0 : index
    %c1_42 = arith.constant 1 : index
    %c0_43 = arith.constant 0 : index
    %c0_44 = arith.constant 0 : index
    %39 = vector.load %arg9[%c0_41, %c1_42, %c0_43, %c0_44] : memref<1x2x1x128xf32, #tpu.memory_space<vmem>>, vector<1x1x1x128xf32>
    %40 = vector.shape_cast %39 : vector<1x1x1x128xf32> to vector<1x128xf32>
    %41 = vector.broadcast %40 : vector<1x128xf32> to vector<16x128xf32>
    %42 = arith.addf %38, %41 : vector<16x128xf32>
    %c0_45 = arith.constant 0 : index
    %c0_46 = arith.constant 0 : index
    %c0_47 = arith.constant 0 : index
    %43 = vector.load %arg10[%c0_45, %c0_46, %c0_47] : memref<1x128x128xf32, #tpu.memory_space<vmem>>, vector<1x128x128xf32>
    %44 = vector.shape_cast %43 : vector<1x128x128xf32> to vector<128x128xf32>
    %cst_48 = arith.constant dense<0.000000e+00> : vector<16x128xf32>
    %45 = tpu.matmul %42, %44, %cst_48 {dimension_numbers = #tpu.dot_dimension_numbers<[1], [0], [0], [1], [0, 0, 1, 1], [], []>} : vector<16x128xf32>, vector<128x128xf32>, vector<16x128xf32> -> vector<16x128xf32>
    %c0_49 = arith.constant 0 : index
    %c0_50 = arith.constant 0 : index
    %c0_51 = arith.constant 0 : index
    %46 = vector.load %arg11[%c0_49, %c0_50, %c0_51] : memref<1x1x128xf32, #tpu.memory_space<vmem>>, vector<1x1x128xf32>
    %47 = vector.shape_cast %46 : vector<1x1x128xf32> to vector<1x128xf32>
    %48 = vector.broadcast %47 : vector<1x128xf32> to vector<16x128xf32>
    %49 = arith.addf %45, %48 : vector<16x128xf32>
    %50 = vector.shape_cast %49 : vector<16x128xf32> to vector<2x8x128xf32>
    %c0_52 = arith.constant 0 : index
    %c0_53 = arith.constant 0 : index
    %c0_54 = arith.constant 0 : index
    %c0_55 = arith.constant 0 : index
    %51 = vector.load %arg3[%c0_52, %c0_53, %c0_54, %c0_55] : memref<2x1x8x8xf32, #tpu.memory_space<vmem>>, vector<2x1x8x8xf32>
    %52 = vector.shape_cast %51 : vector<2x1x8x8xf32> to vector<2x8x8xf32>
    %53 = vector.extract_strided_slice %52 {offsets = [0, 0, 0], sizes = [2, 8, 1], strides = [1, 1, 1]} : vector<2x8x8xf32> to vector<2x8x1xf32>
    %54 = vector.extract_strided_slice %50 {offsets = [0, 0, 0], sizes = [2, 1, 128], strides = [1, 1, 1]} : vector<2x8x128xf32> to vector<2x1x128xf32>
    %55 = vector.broadcast %53 : vector<2x8x1xf32> to vector<2x8x128xf32>
    %56 = vector.broadcast %54 : vector<2x1x128xf32> to vector<2x8x128xf32>
    %57 = arith.mulf %55, %56 : vector<2x8x128xf32>
    %58 = vector.extract_strided_slice %52 {offsets = [0, 0, 1], sizes = [2, 8, 1], strides = [1, 1, 1]} : vector<2x8x8xf32> to vector<2x8x1xf32>
    %59 = vector.extract_strided_slice %50 {offsets = [0, 1, 0], sizes = [2, 1, 128], strides = [1, 1, 1]} : vector<2x8x128xf32> to vector<2x1x128xf32>
    %60 = vector.broadcast %58 : vector<2x8x1xf32> to vector<2x8x128xf32>
    %61 = vector.broadcast %59 : vector<2x1x128xf32> to vector<2x8x128xf32>
    %62 = arith.mulf %60, %61 : vector<2x8x128xf32>
    %63 = arith.addf %57, %62 : vector<2x8x128xf32>
    %64 = vector.extract_strided_slice %52 {offsets = [0, 0, 2], sizes = [2, 8, 1], strides = [1, 1, 1]} : vector<2x8x8xf32> to vector<2x8x1xf32>
    %65 = vector.extract_strided_slice %50 {offsets = [0, 2, 0], sizes = [2, 1, 128], strides = [1, 1, 1]} : vector<2x8x128xf32> to vector<2x1x128xf32>
    %66 = vector.broadcast %64 : vector<2x8x1xf32> to vector<2x8x128xf32>
    %67 = vector.broadcast %65 : vector<2x1x128xf32> to vector<2x8x128xf32>
    %68 = arith.mulf %66, %67 : vector<2x8x128xf32>
    %69 = arith.addf %63, %68 : vector<2x8x128xf32>
    %70 = vector.extract_strided_slice %52 {offsets = [0, 0, 3], sizes = [2, 8, 1], strides = [1, 1, 1]} : vector<2x8x8xf32> to vector<2x8x1xf32>
    %71 = vector.extract_strided_slice %50 {offsets = [0, 3, 0], sizes = [2, 1, 128], strides = [1, 1, 1]} : vector<2x8x128xf32> to vector<2x1x128xf32>
    %72 = vector.broadcast %70 : vector<2x8x1xf32> to vector<2x8x128xf32>
    %73 = vector.broadcast %71 : vector<2x1x128xf32> to vector<2x8x128xf32>
    %74 = arith.mulf %72, %73 : vector<2x8x128xf32>
    %75 = arith.addf %69, %74 : vector<2x8x128xf32>
    %76 = vector.extract_strided_slice %52 {offsets = [0, 0, 4], sizes = [2, 8, 1], strides = [1, 1, 1]} : vector<2x8x8xf32> to vector<2x8x1xf32>
    %77 = vector.extract_strided_slice %50 {offsets = [0, 4, 0], sizes = [2, 1, 128], strides = [1, 1, 1]} : vector<2x8x128xf32> to vector<2x1x128xf32>
    %78 = vector.broadcast %76 : vector<2x8x1xf32> to vector<2x8x128xf32>
    %79 = vector.broadcast %77 : vector<2x1x128xf32> to vector<2x8x128xf32>
    %80 = arith.mulf %78, %79 : vector<2x8x128xf32>
    %81 = arith.addf %75, %80 : vector<2x8x128xf32>
    %82 = vector.extract_strided_slice %52 {offsets = [0, 0, 5], sizes = [2, 8, 1], strides = [1, 1, 1]} : vector<2x8x8xf32> to vector<2x8x1xf32>
    %83 = vector.extract_strided_slice %50 {offsets = [0, 5, 0], sizes = [2, 1, 128], strides = [1, 1, 1]} : vector<2x8x128xf32> to vector<2x1x128xf32>
    %84 = vector.broadcast %82 : vector<2x8x1xf32> to vector<2x8x128xf32>
    %85 = vector.broadcast %83 : vector<2x1x128xf32> to vector<2x8x128xf32>
    %86 = arith.mulf %84, %85 : vector<2x8x128xf32>
    %87 = arith.addf %81, %86 : vector<2x8x128xf32>
    %88 = vector.extract_strided_slice %52 {offsets = [0, 0, 6], sizes = [2, 8, 1], strides = [1, 1, 1]} : vector<2x8x8xf32> to vector<2x8x1xf32>
    %89 = vector.extract_strided_slice %50 {offsets = [0, 6, 0], sizes = [2, 1, 128], strides = [1, 1, 1]} : vector<2x8x128xf32> to vector<2x1x128xf32>
    %90 = vector.broadcast %88 : vector<2x8x1xf32> to vector<2x8x128xf32>
    %91 = vector.broadcast %89 : vector<2x1x128xf32> to vector<2x8x128xf32>
    %92 = arith.mulf %90, %91 : vector<2x8x128xf32>
    %93 = arith.addf %87, %92 : vector<2x8x128xf32>
    %94 = vector.extract_strided_slice %52 {offsets = [0, 0, 7], sizes = [2, 8, 1], strides = [1, 1, 1]} : vector<2x8x8xf32> to vector<2x8x1xf32>
    %95 = vector.extract_strided_slice %50 {offsets = [0, 7, 0], sizes = [2, 1, 128], strides = [1, 1, 1]} : vector<2x8x128xf32> to vector<2x1x128xf32>
    %96 = vector.broadcast %94 : vector<2x8x1xf32> to vector<2x8x128xf32>
    %97 = vector.broadcast %95 : vector<2x1x128xf32> to vector<2x8x128xf32>
    %98 = arith.mulf %96, %97 : vector<2x8x128xf32>
    %99 = arith.addf %93, %98 : vector<2x8x128xf32>
    %cst_56 = arith.constant 0.000000e+00 : f32
    %100 = vector.broadcast %cst_56 : f32 to vector<2x8x128xf32>
    %101 = arith.maximumf %99, %100 : vector<2x8x128xf32>
    %c0_57 = arith.constant 0 : index
    %c0_58 = arith.constant 0 : index
    %c0_59 = arith.constant 0 : index
    %c0_60 = arith.constant 0 : index
    %102 = vector.load %arg12[%c0_57, %c0_58, %c0_59, %c0_60] : memref<2x1x8x128xf32, #tpu.memory_space<vmem>>, vector<2x1x8x128xf32>
    %103 = vector.shape_cast %102 : vector<2x1x8x128xf32> to vector<2x8x128xf32>
    %104 = vector.shape_cast %101 : vector<2x8x128xf32> to vector<2x1x8x128xf32>
    tpu.vector_store %arg12[%c0_57, %c0_58, %c0_59, %c0_60], %104 {strides = array<i32>} : memref<2x1x8x128xf32, #tpu.memory_space<vmem>>, vector<2x1x8x128xf32>,
    return
  }
  func.func @transform_0(%arg0: i32, %arg1: i32) -> (i32, i32, i32) {
    %c0_i32 = arith.constant 0 : i32
    %c0_i32_0 = arith.constant 0 : i32
    %c0_i32_1 = arith.constant 0 : i32
    return %arg1, %c0_i32, %c0_i32_0 : i32, i32, i32
  }
  func.func @transform_1(%arg0: i32, %arg1: i32) -> (i32, i32, i32, i32) {
    %c0_i32 = arith.constant 0 : i32
    %c0_i32_0 = arith.constant 0 : i32
    %c0_i32_1 = arith.constant 0 : i32
    return %arg1, %arg0, %c0_i32, %c0_i32_0 : i32, i32, i32, i32
  }
  func.func @transform_2(%arg0: i32, %arg1: i32) -> (i32, i32, i32) {
    %c0_i32 = arith.constant 0 : i32
    %c0_i32_0 = arith.constant 0 : i32
    %c0_i32_1 = arith.constant 0 : i32
    return %arg0, %c0_i32, %c0_i32_0 : i32, i32, i32
  }
  func.func @transform_3(%arg0: i32, %arg1: i32) -> (i32, i32, i32) {
    %c0_i32 = arith.constant 0 : i32
    %c0_i32_0 = arith.constant 0 : i32
    %c0_i32_1 = arith.constant 0 : i32
    return %arg0, %c0_i32, %c0_i32_0 : i32, i32, i32
  }
  func.func @transform_4(%arg0: i32, %arg1: i32) -> (i32, i32, i32, i32) {
    %c0_i32 = arith.constant 0 : i32
    %c0_i32_0 = arith.constant 0 : i32
    %c0_i32_1 = arith.constant 0 : i32
    %c0_i32_2 = arith.constant 0 : i32
    return %arg0, %c0_i32, %c0_i32_0, %c0_i32_1 : i32, i32, i32, i32
  }
  func.func @transform_5(%arg0: i32, %arg1: i32) -> (i32, i32, i32, i32) {
    %c0_i32 = arith.constant 0 : i32
    %c0_i32_0 = arith.constant 0 : i32
    %c0_i32_1 = arith.constant 0 : i32
    %c0_i32_2 = arith.constant 0 : i32
    return %arg0, %c0_i32, %c0_i32_0, %c0_i32_1 : i32, i32, i32, i32
  }
  func.func @transform_6(%arg0: i32, %arg1: i32) -> (i32, i32, i32, i32) {
    %c0_i32 = arith.constant 0 : i32
    %c0_i32_0 = arith.constant 0 : i32
    %c0_i32_1 = arith.constant 0 : i32
    %c0_i32_2 = arith.constant 0 : i32
    return %arg0, %c0_i32, %c0_i32_0, %c0_i32_1 : i32, i32, i32, i32
  }
  func.func @transform_7(%arg0: i32, %arg1: i32) -> (i32, i32, i32, i32) {
    %c0_i32 = arith.constant 0 : i32
    %c0_i32_0 = arith.constant 0 : i32
    %c0_i32_1 = arith.constant 0 : i32
    %c0_i32_2 = arith.constant 0 : i32
    return %arg0, %c0_i32, %c0_i32_0, %c0_i32_1 : i32, i32, i32, i32
  }
  func.func @transform_8(%arg0: i32, %arg1: i32) -> (i32, i32, i32) {
    %c0_i32 = arith.constant 0 : i32
    %c0_i32_0 = arith.constant 0 : i32
    %c0_i32_1 = arith.constant 0 : i32
    return %arg0, %c0_i32, %c0_i32_0 : i32, i32, i32
  }
  func.func @transform_9(%arg0: i32, %arg1: i32) -> (i32, i32, i32) {
    %c0_i32 = arith.constant 0 : i32
    %c0_i32_0 = arith.constant 0 : i32
    %c0_i32_1 = arith.constant 0 : i32
    return %arg0, %c0_i32, %c0_i32_0 : i32, i32, i32
  }
  func.func @transform_10(%arg0: i32, %arg1: i32) -> (i32, i32, i32, i32) {
    %c0_i32 = arith.constant 0 : i32
    %c0_i32_0 = arith.constant 0 : i32
    %c0_i32_1 = arith.constant 0 : i32
    return %arg1, %arg0, %c0_i32, %c0_i32_0 : i32, i32, i32, i32
  }
}

</mosaic_0001>

<llo_original>
// kernel: tpu_custom_call.1
$region0: #{tpu_custom_call.1}
  #allocation0 [shape = 'u32[]', space=smem, size = 0x4, offset = 0x4, fixed_abs, tag = 'smem constant byte address 0x4 - core index']
  #allocation1 [shape = 'u32[144,128]{1,0:T(1,128)}', space=vmem, size = 0x12000, scoped, tag = 'internal scratch']
  %s0 = inlined_call_operand.hbm [shape: f32[2,8,128], index: 0, kind: input, shape index: {}]
  %s1 = inlined_call_operand.hbm [shape: f32[2,2,8,8], index: 1, kind: input, shape index: {}]
  %s2 = inlined_call_operand.hbm [shape: f32[2,128,128], index: 2, kind: input, shape index: {}]
  %s3 = inlined_call_operand.vmem [shape: f32[2,1,128], index: 3, kind: input, shape index: {}]
  %s4 = inlined_call_operand.hbm [shape: f32[2,2,128,128], index: 4, kind: input, shape index: {}]
  %s5 = inlined_call_operand.vmem [shape: f32[2,2,1,128], index: 5, kind: input, shape index: {}]
  %s6 = inlined_call_operand.hbm [shape: f32[2,2,128,128], index: 6, kind: input, shape index: {}]
  %s7 = inlined_call_operand.vmem [shape: f32[2,2,1,128], index: 7, kind: input, shape index: {}]
  %s8 = inlined_call_operand.hbm [shape: f32[2,128,128], index: 8, kind: input, shape index: {}]
  %s9 = inlined_call_operand.vmem [shape: f32[2,1,128], index: 9, kind: input, shape index: {}]
  %s10 = inlined_call_operand.hbm [shape: f32[2,2,8,128], index: 10, kind: output, shape index: {}]
  %s11 = sld [smem:[#allocation0]]
  $region97: #{tpu_custom_call.1} parent=0
    _
  %s13 = ssub.s32 1, %s11
  %s14 = scalar_select 0, %s13, %s11
  $region1: #{tpu_custom_call.1} parent=0
    #allocation2 [shape = 'u8[8192]{0}', space=vmem, size = 0x2000, scoped, tag = 'input window, operand 0, single buffered']
    #allocation3 [shape = 's32[2]{0}', space=sflag, size = 0x8, scoped, tag = 'scoped memory for tpu_custom_call.1']
    #allocation4 [shape = 's32[2]{0}', space=sflag, size = 0x8, scoped, tag = 'scoped memory for tpu_custom_call.1']
    #allocation5 [shape = 'u8[16384]{0}', space=vmem, size = 0x4000, scoped, tag = 'input window, operand 1']
    #allocation6 [shape = 's32[2]{0}', space=sflag, size = 0x8, scoped, tag = 'scoped memory for tpu_custom_call.1']
    #allocation7 [shape = 'u8[65536]{0}', space=vmem, size = 0x10000, scoped, tag = 'input window, operand 2, single buffered']
    #allocation8 [shape = 'u8[131072]{0}', space=vmem, size = 0x20000, scoped, tag = 'input window, operand 4, single buffered']
    #allocation9 [shape = 's32[1]{0}', space=sflag, size = 0x4, scoped, tag = 'scoped memory for tpu_custom_call.1']
    #allocation10 [shape = 'u8[131072]{0}', space=vmem, size = 0x20000, scoped, tag = 'input window, operand 6, single buffered']
    #allocation11 [shape = 'u8[65536]{0}', space=vmem, size = 0x10000, scoped, tag = 'input window, operand 8, single buffered']
    #allocation12 [shape = 's32[1]{0}', space=sflag, size = 0x4, scoped, tag = 'scoped memory for tpu_custom_call.1']
    #allocation13 [shape = 'u8[16384]{0}', space=vmem, size = 0x4000, scoped, tag = 'output window, operand 0']
    %15 = vsyncpa [#allocation3], 0
    %16 = vsyncpa [#allocation6], 0
    %s17 = scalar_lea.sflag [#allocation6], 1
    %18 = vsyncpa %s17, 0
    %19 = vsyncpa [#allocation9], 0
    %20 = vsyncpa [#allocation12], 0
    %21 = vsyncpa [#allocation4], 0
    %s22 = scalar_lea.sflag [#allocation4], 1
    %23 = vsyncpa %s22, 0
    loop: start=0, step=1, limit=4
    $region2: #{tpu_custom_call.1} parent=1 // loop_pre_header
      _
    $region3: #{tpu_custom_call.1} parent=1 // loop_header
      %s25 = sphi 0, %s29
      %p26 = scmp.ge.s32.totalorder %s25, 4
      %s32 = sphi 0, %s44
      %s33 = sphi 0, %s40
      %s34 = sphi 0, %s32
      %s35 = sphi 0, %s33
      %s36 = sphi 0, %s34
      %s37 = sphi 0, %s35
      %s47 = sphi 0, %s49
      %s50 = sphi 0, %s47
      %s51 = sphi 0, %s50
      %s67 = sphi 0, %s51
      %s75 = sphi 0, %s77
      %s78 = sphi 0, %s75
      %s79 = sphi 0, %s78
      %s95 = sphi 0, %s79
      %s101 = sphi 0, %s103
      %s104 = sphi 0, %s101
      %s105 = sphi 0, %s104
      %s121 = sphi 0, %s105
      %s127 = sphi 0, %s129
      %s130 = sphi 0, %s127
      %s131 = sphi 0, %s130
      %s147 = sphi 0, %s131
      %s153 = sphi 0, %s155
      %s156 = sphi 0, %s153
      %s157 = sphi 0, %s156
      %s173 = sphi 0, %s157
      %s179 = sphi 0, %s181
      %s182 = sphi 0, %s179
      %s183 = sphi 0, %s182
      %s199 = sphi 0, %s183
      %s205 = sphi 0, %s207
      %s208 = sphi 0, %s205
      %s209 = sphi 0, %s208
      %s225 = sphi 0, %s209
      %s231 = sphi 0, %s233
      %s234 = sphi 0, %s231
      %s235 = sphi 0, %s234
      %s251 = sphi 0, %s235
      %s257 = sphi 0, %s259
      %s260 = sphi 0, %s257
      %s261 = sphi 0, %s260
      %s277 = sphi 0, %s261
      %s283 = sphi 0, %s285
      %s286 = sphi 0, %s283
      %s287 = sphi 0, %s286
      %s303 = sphi 0, %s287
      %s311 = sphi 0, %s313
      %s314 = sphi 0, %s311
      %s315 = sphi 0, %s314
      %s331 = sphi 0, %s315
    $region4: #{tpu_custom_call.1} parent=1 // loop_header_branch
      %28 = sbr.rel (%p26) target = $region8
    $region5: #{tpu_custom_call.1} parent=1 // loop_body
      %s30 = ssub.s32 %s25, 1
      %s31 = ssub.s32 %s25, 2
      %s38 = sadd.s32 1, %s33
      %p39 = scmp.ge.s32.totalorder %s38, 1
      %s40 = scalar_select %p39, 0, %s38
      %s41 = sadd.s32 1, %s32
      %s42 = scalar_select %p39, %s41, %s32
      %p43 = scmp.ge.s32.totalorder %s42, 2
      %s44 = scalar_select %p43, 0, %s42
      %s45 = ssub.s32 %s33, %s40
      %p46 = scmp.eq.s32.totalorder %s45, 0
      %s48 = sadd.s32 %s47, 1
      %s49 = scalar_select %p46, %s47, %s48
      %p52 = pneg %p46
      %p53 = scmp.eq.s32.totalorder %s25, 1
      %p54 = por %p52, %p53
      %p55 = scmp.ne.s32.totalorder %s47, %s50
      %p56 = scmp.eq.s32.totalorder %s25, 0
      %p57 = por %p55, %p56
      %p58 = scmp.ne.s32.totalorder %s47, %s50
      %p59 = scmp.eq.s32.totalorder %s30, 1
      %p60 = por %p58, %p59
      %p61 = scmp.ne.s32.totalorder %s50, %s51
      %p62 = scmp.eq.s32.totalorder %s30, 0
      %p63 = por %p61, %p62
      %p64 = scmp.ne.s32.totalorder %s50, %s51
      %p65 = scmp.eq.s32.totalorder %s31, 1
      %p66 = por %p64, %p65
      %p68 = scmp.ne.s32.totalorder %s51, %s67
      %p69 = scmp.eq.s32.totalorder %s31, 0
      %p70 = por %p68, %p69
      %s71 = ssub.s32 %s33, %s40
      %s72 = ssub.s32 %s32, %s44
      %s73 = sor.u32 %s71, %s72
      %p74 = scmp.eq.s32.totalorder %s73, 0
      %s76 = sadd.s32 %s75, 1
      %s77 = scalar_select %p74, %s75, %s76
      %p80 = pneg %p74
      %p81 = scmp.eq.s32.totalorder %s25, 1
      %p82 = por %p80, %p81
      %p83 = scmp.ne.s32.totalorder %s75, %s78
      %p84 = scmp.eq.s32.totalorder %s25, 0
      %p85 = por %p83, %p84
      %p86 = scmp.ne.s32.totalorder %s75, %s78
      %p87 = scmp.eq.s32.totalorder %s30, 1
      %p88 = por %p86, %p87
      %p89 = scmp.ne.s32.totalorder %s78, %s79
      %p90 = scmp.eq.s32.totalorder %s30, 0
      %p91 = por %p89, %p90
      %p92 = scmp.ne.s32.totalorder %s78, %s79
      %p93 = scmp.eq.s32.totalorder %s31, 1
      %p94 = por %p92, %p93
      %p96 = scmp.ne.s32.totalorder %s79, %s95
      %p97 = scmp.eq.s32.totalorder %s31, 0
      %p98 = por %p96, %p97
      %s99 = ssub.s32 %s32, %s44
      %p100 = scmp.eq.s32.totalorder %s99, 0
      %s102 = sadd.s32 %s101, 1
      %s103 = scalar_select %p100, %s101, %s102
      %p106 = pneg %p100
      %p107 = scmp.eq.s32.totalorder %s25, 1
      %p108 = por %p106, %p107
      %p109 = scmp.ne.s32.totalorder %s101, %s104
      %p110 = scmp.eq.s32.totalorder %s25, 0
      %p111 = por %p109, %p110
      %p112 = scmp.ne.s32.totalorder %s101, %s104
      %p113 = scmp.eq.s32.totalorder %s30, 1
      %p114 = por %p112, %p113
      %p115 = scmp.ne.s32.totalorder %s104, %s105
      %p116 = scmp.eq.s32.totalorder %s30, 0
      %p117 = por %p115, %p116
      %p118 = scmp.ne.s32.totalorder %s104, %s105
      %p119 = scmp.eq.s32.totalorder %s31, 1
      %p120 = por %p118, %p119
      %p122 = scmp.ne.s32.totalorder %s105, %s121
      %p123 = scmp.eq.s32.totalorder %s31, 0
      %p124 = por %p122, %p123
      %s125 = ssub.s32 %s32, %s44
      %p126 = scmp.eq.s32.totalorder %s125, 0
      %s128 = sadd.s32 %s127, 1
      %s129 = scalar_select %p126, %s127, %s128
      %p132 = pneg %p126
      %p133 = scmp.eq.s32.totalorder %s25, 1
      %p134 = por %p132, %p133
      %p135 = scmp.ne.s32.totalorder %s127, %s130
      %p136 = scmp.eq.s32.totalorder %s25, 0
      %p137 = por %p135, %p136
      %p138 = scmp.ne.s32.totalorder %s127, %s130
      %p139 = scmp.eq.s32.totalorder %s30, 1
      %p140 = por %p138, %p139
      %p141 = scmp.ne.s32.totalorder %s130, %s131
      %p142 = scmp.eq.s32.totalorder %s30, 0
      %p143 = por %p141, %p142
      %p144 = scmp.ne.s32.totalorder %s130, %s131
      %p145 = scmp.eq.s32.totalorder %s31, 1
      %p146 = por %p144, %p145
      %p148 = scmp.ne.s32.totalorder %s131, %s147
      %p149 = scmp.eq.s32.totalorder %s31, 0
      %p150 = por %p148, %p149
      %s151 = ssub.s32 %s32, %s44
      %p152 = scmp.eq.s32.totalorder %s151, 0
      %s154 = sadd.s32 %s153, 1
      %s155 = scalar_select %p152, %s153, %s154
      %p158 = pneg %p152
      %p159 = scmp.eq.s32.totalorder %s25, 1
      %p160 = por %p158, %p159
      %p161 = scmp.ne.s32.totalorder %s153, %s156
      %p162 = scmp.eq.s32.totalorder %s25, 0
      %p163 = por %p161, %p162
      %p164 = scmp.ne.s32.totalorder %s153, %s156
      %p165 = scmp.eq.s32.totalorder %s30, 1
      %p166 = por %p164, %p165
      %p167 = scmp.ne.s32.totalorder %s156, %s157
      %p168 = scmp.eq.s32.totalorder %s30, 0
      %p169 = por %p167, %p168
      %p170 = scmp.ne.s32.totalorder %s156, %s157
      %p171 = scmp.eq.s32.totalorder %s31, 1
      %p172 = por %p170, %p171
      %p174 = scmp.ne.s32.totalorder %s157, %s173
      %p175 = scmp.eq.s32.totalorder %s31, 0
      %p176 = por %p174, %p175
      %s177 = ssub.s32 %s32, %s44
      %p178 = scmp.eq.s32.totalorder %s177, 0
      %s180 = sadd.s32 %s179, 1
      %s181 = scalar_select %p178, %s179, %s180
      %p184 = pneg %p178
      %p185 = scmp.eq.s32.totalorder %s25, 1
      %p186 = por %p184, %p185
      %p187 = scmp.ne.s32.totalorder %s179, %s182
      %p188 = scmp.eq.s32.totalorder %s25, 0
      %p189 = por %p187, %p188
      %p190 = scmp.ne.s32.totalorder %s179, %s182
      %p191 = scmp.eq.s32.totalorder %s30, 1
      %p192 = por %p190, %p191
      %p193 = scmp.ne.s32.totalorder %s182, %s183
      %p194 = scmp.eq.s32.totalorder %s30, 0
      %p195 = por %p193, %p194
      %p196 = scmp.ne.s32.totalorder %s182, %s183
      %p197 = scmp.eq.s32.totalorder %s31, 1
      %p198 = por %p196, %p197
      %p200 = scmp.ne.s32.totalorder %s183, %s199
      %p201 = scmp.eq.s32.totalorder %s31, 0
      %p202 = por %p200, %p201
      %s203 = ssub.s32 %s32, %s44
      %p204 = scmp.eq.s32.totalorder %s203, 0
      %s206 = sadd.s32 %s205, 1
      %s207 = scalar_select %p204, %s205, %s206
      %p210 = pneg %p204
      %p211 = scmp.eq.s32.totalorder %s25, 1
      %p212 = por %p210, %p211
      %p213 = scmp.ne.s32.totalorder %s205, %s208
      %p214 = scmp.eq.s32.totalorder %s25, 0
      %p215 = por %p213, %p214
      %p216 = scmp.ne.s32.totalorder %s205, %s208
      %p217 = scmp.eq.s32.totalorder %s30, 1
      %p218 = por %p216, %p217
      %p219 = scmp.ne.s32.totalorder %s208, %s209
      %p220 = scmp.eq.s32.totalorder %s30, 0
      %p221 = por %p219, %p220
      %p222 = scmp.ne.s32.totalorder %s208, %s209
      %p223 = scmp.eq.s32.totalorder %s31, 1
      %p224 = por %p222, %p223
      %p226 = scmp.ne.s32.totalorder %s209, %s225
      %p227 = scmp.eq.s32.totalorder %s31, 0
      %p228 = por %p226, %p227
      %s229 = ssub.s32 %s32, %s44
      %p230 = scmp.eq.s32.totalorder %s229, 0
      %s232 = sadd.s32 %s231, 1
      %s233 = scalar_select %p230, %s231, %s232
      %p236 = pneg %p230
      %p237 = scmp.eq.s32.totalorder %s25, 1
      %p238 = por %p236, %p237
      %p239 = scmp.ne.s32.totalorder %s231, %s234
      %p240 = scmp.eq.s32.totalorder %s25, 0
      %p241 = por %p239, %p240
      %p242 = scmp.ne.s32.totalorder %s231, %s234
      %p243 = scmp.eq.s32.totalorder %s30, 1
      %p244 = por %p242, %p243
      %p245 = scmp.ne.s32.totalorder %s234, %s235
      %p246 = scmp.eq.s32.totalorder %s30, 0
      %p247 = por %p245, %p246
      %p248 = scmp.ne.s32.totalorder %s234, %s235
      %p249 = scmp.eq.s32.totalorder %s31, 1
      %p250 = por %p248, %p249
      %p252 = scmp.ne.s32.totalorder %s235, %s251
      %p253 = scmp.eq.s32.totalorder %s31, 0
      %p254 = por %p252, %p253
      %s255 = ssub.s32 %s32, %s44
      %p256 = scmp.eq.s32.totalorder %s255, 0
      %s258 = sadd.s32 %s257, 1
      %s259 = scalar_select %p256, %s257, %s258
      %p262 = pneg %p256
      %p263 = scmp.eq.s32.totalorder %s25, 1
      %p264 = por %p262, %p263
      %p265 = scmp.ne.s32.totalorder %s257, %s260
      %p266 = scmp.eq.s32.totalorder %s25, 0
      %p267 = por %p265, %p266
      %p268 = scmp.ne.s32.totalorder %s257, %s260
      %p269 = scmp.eq.s32.totalorder %s30, 1
      %p270 = por %p268, %p269
      %p271 = scmp.ne.s32.totalorder %s260, %s261
      %p272 = scmp.eq.s32.totalorder %s30, 0
      %p273 = por %p271, %p272
      %p274 = scmp.ne.s32.totalorder %s260, %s261
      %p275 = scmp.eq.s32.totalorder %s31, 1
      %p276 = por %p274, %p275
      %p278 = scmp.ne.s32.totalorder %s261, %s277
      %p279 = scmp.eq.s32.totalorder %s31, 0
      %p280 = por %p278, %p279
      %s281 = ssub.s32 %s32, %s44
      %p282 = scmp.eq.s32.totalorder %s281, 0
      %s284 = sadd.s32 %s283, 1
      %s285 = scalar_select %p282, %s283, %s284
      %p288 = pneg %p282
      %p289 = scmp.eq.s32.totalorder %s25, 1
      %p290 = por %p288, %p289
      %p291 = scmp.ne.s32.totalorder %s283, %s286
      %p292 = scmp.eq.s32.totalorder %s25, 0
      %p293 = por %p291, %p292
      %p294 = scmp.ne.s32.totalorder %s283, %s286
      %p295 = scmp.eq.s32.totalorder %s30, 1
      %p296 = por %p294, %p295
      %p297 = scmp.ne.s32.totalorder %s286, %s287
      %p298 = scmp.eq.s32.totalorder %s30, 0
      %p299 = por %p297, %p298
      %p300 = scmp.ne.s32.totalorder %s286, %s287
      %p301 = scmp.eq.s32.totalorder %s31, 1
      %p302 = por %p300, %p301
      %p304 = scmp.ne.s32.totalorder %s287, %s303
      %p305 = scmp.eq.s32.totalorder %s31, 0
      %p306 = por %p304, %p305
      %s307 = ssub.s32 %s33, %s40
      %s308 = ssub.s32 %s32, %s44
      %s309 = sor.u32 %s307, %s308
      %p310 = scmp.eq.s32.totalorder %s309, 0
      %s312 = sadd.s32 %s311, 1
      %s313 = scalar_select %p310, %s311, %s312
      %p316 = pneg %p310
      %p317 = scmp.eq.s32.totalorder %s25, 1
      %p318 = por %p316, %p317
      %p319 = scmp.ne.s32.totalorder %s311, %s314
      %p320 = scmp.eq.s32.totalorder %s25, 0
      %p321 = por %p319, %p320
      %p322 = scmp.ne.s32.totalorder %s311, %s314
      %p323 = scmp.eq.s32.totalorder %s30, 1
      %p324 = por %p322, %p323
      %p325 = scmp.ne.s32.totalorder %s314, %s315
      %p326 = scmp.eq.s32.totalorder %s30, 0
      %p327 = por %p325, %p326
      %p328 = scmp.ne.s32.totalorder %s314, %s315
      %p329 = scmp.eq.s32.totalorder %s31, 1
      %p330 = por %p328, %p329
      %p332 = scmp.ne.s32.totalorder %s315, %s331
      %p333 = scmp.eq.s32.totalorder %s31, 0
      %p334 = por %p332, %p333
      %p335 = scmp.le.s32.totalorder 1, %s25
      %p336 = scmp.lt.s32.totalorder %s25, 3
      %p337 = pnand %p335, %p336
      %p338 = pneg %p337
      // Predicated region
      $region9: #{tpu_custom_call.1} parent=5 // pred_check
        _
      $region10: #{tpu_custom_call.1} parent=5 // pred_check_branch
        %340 = sbr.rel (%p337) target = $region12
      $region11: #{tpu_custom_call.1} parent=5 // pred_region
        %s341 = ssub.s32 %s25, 1
        // Predicated region
        $region13: #{tpu_custom_call.1} parent=11 // pred_check
          %p342 = pneg %p63
        $region14: #{tpu_custom_call.1} parent=11 // pred_check_branch
          %344 = sbr.rel (%p342) target = $region16
        $region15: #{tpu_custom_call.1} parent=11 // pred_region
          %s345 = smul.u32 2, %s35
          %s347 = ssub.s32 256, 256
          %348 = vsyncadd [#allocation3], %s347
          %s349 = smul.addr %s345, 128
          %s350 = scalar_lea.hbm %s0, %s349
          %s351 = sshll.u32 [#allocation2], 4
          %s352 = int_to_ptr.vmem [resolvable:$true] %s351
          %357 = dma.hbm_to_vmem [thread:$0]  %s350, 256, %s352, [#allocation3], 128, 128, 8
        $region16: #{tpu_custom_call.1} parent=11 // pred_fallthru
          _
        // Predicated region
        $region17: #{tpu_custom_call.1} parent=11 // pred_check
          %p358 = pneg %p117
        $region18: #{tpu_custom_call.1} parent=11 // pred_check_branch
          %360 = sbr.rel (%p358) target = $region20
        $region19: #{tpu_custom_call.1} parent=11 // pred_region
          %s362 = ssub.s32 2048, 2048
          %363 = vsyncadd [#allocation6], %s362
          %s364 = smul.addr %s34, 16
          %s365 = smul.addr %s364, 128
          %s366 = scalar_lea.hbm %s2, %s365
          %s367 = sshll.u32 [#allocation7], 4
          %s368 = int_to_ptr.vmem [resolvable:$true] %s367
          %373 = dma.hbm_to_vmem [thread:$0]  %s366, 2048, %s368, [#allocation6], 128, 128, 8
        $region20: #{tpu_custom_call.1} parent=11 // pred_fallthru
          _
        // Predicated region
        $region21: #{tpu_custom_call.1} parent=11 // pred_check
          %p374 = pneg %p143
        $region22: #{tpu_custom_call.1} parent=11 // pred_check_branch
          %376 = sbr.rel (%p374) target = $region24
        $region23: #{tpu_custom_call.1} parent=11 // pred_region
          %p377 = scmp.lt.s32.totalorder %s34, 1
          %s378 = scalar_select %p377, %s34, 1
          %s379 = scalar_lea.vmem %s3, %s378
        $region24: #{tpu_custom_call.1} parent=11 // pred_fallthru
          _
        // Predicated region
        $region25: #{tpu_custom_call.1} parent=11 // pred_check
          %p380 = pneg %p169
        $region26: #{tpu_custom_call.1} parent=11 // pred_check_branch
          %382 = sbr.rel (%p380) target = $region28
        $region27: #{tpu_custom_call.1} parent=11 // pred_region
          %s384 = ssub.s32 4096, 4096
          %385 = vsyncadd [#allocation9], %s384
          %s386 = smul.addr %s34, 32
          %s387 = smul.addr %s386, 128
          %s388 = scalar_lea.hbm %s4, %s387
          %s389 = sshll.u32 [#allocation8], 4
          %s390 = int_to_ptr.vmem [resolvable:$true] %s389
          %395 = dma.hbm_to_vmem [thread:$0]  %s388, 4096, %s390, [#allocation9], 128, 128, 8
        $region28: #{tpu_custom_call.1} parent=11 // pred_fallthru
          _
        // Predicated region
        $region29: #{tpu_custom_call.1} parent=11 // pred_check
          %p396 = pneg %p195
        $region30: #{tpu_custom_call.1} parent=11 // pred_check_branch
          %398 = sbr.rel (%p396) target = $region32
        $region31: #{tpu_custom_call.1} parent=11 // pred_region
          %p399 = scmp.lt.s32.totalorder %s34, 1
          %s400 = scalar_select %p399, %s34, 1
          %s401 = smul.addr %s400, 2
          %s402 = scalar_lea.vmem %s5, %s401
        $region32: #{tpu_custom_call.1} parent=11 // pred_fallthru
          _
        // Predicated region
        $region33: #{tpu_custom_call.1} parent=11 // pred_check
          %p403 = pneg %p221
        $region34: #{tpu_custom_call.1} parent=11 // pred_check_branch
          %405 = sbr.rel (%p403) target = $region36
        $region35: #{tpu_custom_call.1} parent=11 // pred_region
          %s407 = ssub.s32 4096, 4096
          %408 = vsyncadd [#allocation9], %s407
          %s409 = smul.addr %s34, 32
          %s410 = smul.addr %s409, 128
          %s411 = scalar_lea.hbm %s6, %s410
          %s412 = sshll.u32 [#allocation10], 4
          %s413 = int_to_ptr.vmem [resolvable:$true] %s412
          %418 = dma.hbm_to_vmem [thread:$0]  %s411, 4096, %s413, [#allocation9], 128, 128, 8
        $region36: #{tpu_custom_call.1} parent=11 // pred_fallthru
          _
        // Predicated region
        $region37: #{tpu_custom_call.1} parent=11 // pred_check
          %p419 = pneg %p247
        $region38: #{tpu_custom_call.1} parent=11 // pred_check_branch
          %421 = sbr.rel (%p419) target = $region40
        $region39: #{tpu_custom_call.1} parent=11 // pred_region
          %p422 = scmp.lt.s32.totalorder %s34, 1
          %s423 = scalar_select %p422, %s34, 1
          %s424 = smul.addr %s423, 2
          %s425 = scalar_lea.vmem %s7, %s424
        $region40: #{tpu_custom_call.1} parent=11 // pred_fallthru
          _
        // Predicated region
        $region41: #{tpu_custom_call.1} parent=11 // pred_check
          %p426 = pneg %p273
        $region42: #{tpu_custom_call.1} parent=11 // pred_check_branch
          %428 = sbr.rel (%p426) target = $region44
        $region43: #{tpu_custom_call.1} parent=11 // pred_region
          %s430 = ssub.s32 2048, 2048
          %431 = vsyncadd [#allocation12], %s430
          %s432 = smul.addr %s34, 16
          %s433 = smul.addr %s432, 128
          %s434 = scalar_lea.hbm %s8, %s433
          %s435 = sshll.u32 [#allocation11], 4
          %s436 = int_to_ptr.vmem [resolvable:$true] %s435
          %441 = dma.hbm_to_vmem [thread:$0]  %s434, 2048, %s436, [#allocation12], 128, 128, 8
        $region44: #{tpu_custom_call.1} parent=11 // pred_fallthru
          _
        // Predicated region
        $region45: #{tpu_custom_call.1} parent=11 // pred_check
          %p442 = pneg %p299
        $region46: #{tpu_custom_call.1} parent=11 // pred_check_branch
          %444 = sbr.rel (%p442) target = $region48
        $region47: #{tpu_custom_call.1} parent=11 // pred_region
          %p445 = scmp.lt.s32.totalorder %s34, 1
          %s446 = scalar_select %p445, %s34, 1
          %s447 = scalar_lea.vmem %s9, %s446
        $region48: #{tpu_custom_call.1} parent=11 // pred_fallthru
          _
      $region12: #{tpu_custom_call.1} parent=5 // pred_fallthru
        _
      %p448 = scmp.lt.s32.totalorder %s25, 2
      // Predicated region
      $region49: #{tpu_custom_call.1} parent=5 // pred_check
        %p449 = pneg %p448
      $region50: #{tpu_custom_call.1} parent=5 // pred_check_branch
        %451 = sbr.rel (%p449) target = $region52
      $region51: #{tpu_custom_call.1} parent=5 // pred_region
        // Predicated region
        $region53: #{tpu_custom_call.1} parent=51 // pred_check
          %p452 = pneg %p85
        $region54: #{tpu_custom_call.1} parent=51 // pred_check_branch
          %454 = sbr.rel (%p452) target = $region56
        $region55: #{tpu_custom_call.1} parent=51 // pred_region
          %s455 = sand.u32 %s25, 1
          %s456 = scalar_lea.sflag [#allocation6], %s455
          %s457 = sand.u32 %s75, 1
          %s458 = smul.addr %s457, 16
          %s459 = scalar_lea.vmem [#allocation5], %s458
          %s460 = smul.u32 2, %s33
          %s462 = ssub.s32 256, 256
          %463 = vsyncadd %s456, %s462
          %s464 = smul.addr %s460, 2
          %s465 = sadd.s32 %s32, %s464
          %s466 = smul.addr %s465, 128
          %s467 = scalar_lea.hbm %s1, %s466
          %s468 = sshll.u32 %s459, 4
          %s469 = int_to_ptr.vmem [resolvable:$true] %s468
          %474 = dma.hbm_to_vmem [thread:$0]  %s467, 256, %s469, %s456, 256, 128, 8
        $region56: #{tpu_custom_call.1} parent=51 // pred_fallthru
          _
      $region52: #{tpu_custom_call.1} parent=5 // pred_fallthru
        _
      %p475 = scmp.le.s32.totalorder 1, %s25
      %p476 = scmp.lt.s32.totalorder %s25, 3
      %p477 = pnand %p475, %p476
      %p478 = pneg %p477
      // Predicated region
      $region57: #{tpu_custom_call.1} parent=5 // pred_check
        _
      $region58: #{tpu_custom_call.1} parent=5 // pred_check_branch
        %480 = sbr.rel (%p477) target = $region60
      $region59: #{tpu_custom_call.1} parent=5 // pred_region
        %s481 = ssub.s32 %s25, 1
        // Predicated region
        $region61: #{tpu_custom_call.1} parent=59 // pred_check
          %p482 = pneg %p63
        $region62: #{tpu_custom_call.1} parent=59 // pred_check_branch
          %484 = sbr.rel (%p482) target = $region64
        $region63: #{tpu_custom_call.1} parent=59 // pred_region
          %485 = dma.done [#allocation3], 256
        $region64: #{tpu_custom_call.1} parent=59 // pred_fallthru
          _
        %s486 = sand.u32 %s30, 1
        %s487 = scalar_lea.sflag [#allocation6], %s486
        %s488 = sand.u32 %s78, 1
        %s489 = smul.addr %s488, 16
        %s490 = scalar_lea.vmem [#allocation5], %s489
        // Predicated region
        $region65: #{tpu_custom_call.1} parent=59 // pred_check
          %p491 = pneg %p91
        $region66: #{tpu_custom_call.1} parent=59 // pred_check_branch
          %493 = sbr.rel (%p491) target = $region68
        $region67: #{tpu_custom_call.1} parent=59 // pred_region
          %494 = dma.done %s487, 256
        $region68: #{tpu_custom_call.1} parent=59 // pred_fallthru
          _
        // Predicated region
        $region69: #{tpu_custom_call.1} parent=59 // pred_check
          %p495 = pneg %p117
        $region70: #{tpu_custom_call.1} parent=59 // pred_check_branch
          %497 = sbr.rel (%p495) target = $region72
        $region71: #{tpu_custom_call.1} parent=59 // pred_region
          %498 = dma.done [#allocation6], 2048
        $region72: #{tpu_custom_call.1} parent=59 // pred_fallthru
          _
        // Predicated region
        $region73: #{tpu_custom_call.1} parent=59 // pred_check
          %p499 = pneg %p169
        $region74: #{tpu_custom_call.1} parent=59 // pred_check_branch
          %501 = sbr.rel (%p499) target = $region76
        $region75: #{tpu_custom_call.1} parent=59 // pred_region
          %502 = dma.done [#allocation9], 4096
        $region76: #{tpu_custom_call.1} parent=59 // pred_fallthru
          _
        // Predicated region
        $region77: #{tpu_custom_call.1} parent=59 // pred_check
          %p503 = pneg %p221
        $region78: #{tpu_custom_call.1} parent=59 // pred_check_branch
          %505 = sbr.rel (%p503) target = $region80
        $region79: #{tpu_custom_call.1} parent=59 // pred_region
          %506 = dma.done [#allocation9], 4096
        $region80: #{tpu_custom_call.1} parent=59 // pred_fallthru
          _
        // Predicated region
        $region81: #{tpu_custom_call.1} parent=59 // pred_check
          %p507 = pneg %p273
        $region82: #{tpu_custom_call.1} parent=59 // pred_check_branch
          %509 = sbr.rel (%p507) target = $region84
        $region83: #{tpu_custom_call.1} parent=59 // pred_region
          %510 = dma.done [#allocation12], 2048
        $region84: #{tpu_custom_call.1} parent=59 // pred_fallthru
          _
        %p511 = pneg %p63
        %p512 = pneg %p60
        %s513 = sand.u32 %s30, 1
        %s514 = scalar_lea.sflag [#allocation6], %s513
        %s515 = sand.u32 %s78, 1
        %s516 = smul.addr %s515, 16
        %s517 = scalar_lea.vmem [#allocation5], %s516
        %p518 = pneg %p91
        %p519 = pneg %p88
        %p520 = pneg %p117
        %p521 = pneg %p114
        %p522 = scmp.lt.s32.totalorder %s34, 1
        %s523 = scalar_select %p522, %s34, 1
        %s524 = scalar_lea.vmem %s3, %s523
        %p525 = pneg %p143
        %p526 = pneg %p140
        %p527 = pneg %p169
        %p528 = pneg %p166
        %p529 = scmp.lt.s32.totalorder %s34, 1
        %s530 = scalar_select %p529, %s34, 1
        %s531 = smul.addr %s530, 2
        %s532 = scalar_lea.vmem %s5, %s531
        %p533 = pneg %p195
        %p534 = pneg %p192
        %p535 = pneg %p221
        %p536 = pneg %p218
        %p537 = scmp.lt.s32.totalorder %s34, 1
        %s538 = scalar_select %p537, %s34, 1
        %s539 = smul.addr %s538, 2
        %s540 = scalar_lea.vmem %s7, %s539
        %p541 = pneg %p247
        %p542 = pneg %p244
        %p543 = pneg %p273
        %p544 = pneg %p270
        %p545 = scmp.lt.s32.totalorder %s34, 1
        %s546 = scalar_select %p545, %s34, 1
        %s547 = scalar_lea.vmem %s9, %s546
        %p548 = pneg %p299
        %p549 = pneg %p296
        %p550 = pneg %p327
        %p551 = pneg %p324
        %s552 = sand.u32 %s314, 1
        %s553 = scalar_lea.sflag [#allocation4], %s552
        %s554 = sand.u32 %s314, 1
        %s555 = smul.addr %s554, 16
        %s556 = scalar_lea.vmem [#allocation13], %s555
        %s557 = smul.u32 2, %s35
        %s558 = smul.u32 2, %s35
        %p559 = scmp.lt.s32.totalorder %s34, 1
        %s560 = scalar_select %p559, %s34, 1
        %s561 = scalar_lea.vmem %s3, %s560
        %p562 = scmp.lt.s32.totalorder %s34, 1
        %s563 = scalar_select %p562, %s34, 1
        %s564 = smul.addr %s563, 2
        %s565 = scalar_lea.vmem %s5, %s564
        %p566 = scmp.lt.s32.totalorder %s34, 1
        %s567 = scalar_select %p566, %s34, 1
        %s568 = smul.addr %s567, 2
        %s569 = scalar_lea.vmem %s7, %s568
        %p570 = scmp.lt.s32.totalorder %s34, 1
        %s571 = scalar_select %p570, %s34, 1
        %s572 = scalar_lea.vmem %s9, %s571
        %s573 = smul.u32 2, %s35
        %v574 = vld [vmem:[#allocation2] sm:$0xff]
        %v575 = vld [vmem:[#allocation2 + $0x8] sm:$0xff]
        %v576 = vld [vmem:[#allocation7] sm:$0xff]
        %v577 = vld [vmem:[#allocation7 + $0x8] sm:$0xff]
        %v578 = vld [vmem:[#allocation7 + $0x10] sm:$0xff]
        %v579 = vld [vmem:[#allocation7 + $0x18] sm:$0xff]
        %v580 = vld [vmem:[#allocation7 + $0x20] sm:$0xff]
        %v581 = vld [vmem:[#allocation7 + $0x28] sm:$0xff]
        %v582 = vld [vmem:[#allocation7 + $0x30] sm:$0xff]
        %v583 = vld [vmem:[#allocation7 + $0x38] sm:$0xff]
        %v584 = vld [vmem:[#allocation7 + $0x40] sm:$0xff]
        %v585 = vld [vmem:[#allocation7 + $0x48] sm:$0xff]
        %v586 = vld [vmem:[#allocation7 + $0x50] sm:$0xff]
        %v587 = vld [vmem:[#allocation7 + $0x58] sm:$0xff]
        %v588 = vld [vmem:[#allocation7 + $0x60] sm:$0xff]
        %v589 = vld [vmem:[#allocation7 + $0x68] sm:$0xff]
        %v590 = vld [vmem:[#allocation7 + $0x70] sm:$0xff]
        %v591 = vld [vmem:[#allocation7 + $0x78] sm:$0xff]
        %v592 = vld [vmem:[%s561] sm:$0x1]
        %v594 = vlaneseq
        %v595 = vshrl.u32 %v594, 7
        %v596 = vsub.s32 0, %v595
        %v597 = vrot.slane %v592, %v596
        %599 = vmatprep.subr.mxu0 0.0
        %600 = vmatpush1.msra.mxu0 %v576
        %601 = vmatprep.subr.mxu0 0.0
        %602 = vmatpush1.msra.mxu0 %v577
        %603 = vmatprep.subr.mxu0 0.0
        %604 = vmatpush1.msra.mxu0 %v578
        %605 = vmatprep.subr.mxu0 0.0
        %606 = vmatpush1.msra.mxu0 %v579
        %607 = vmatprep.subr.mxu0 0.0
        %608 = vmatpush1.msra.mxu0 %v580
        %609 = vmatprep.subr.mxu0 0.0
        %610 = vmatpush1.msra.mxu0 %v581
        %611 = vmatprep.subr.mxu0 0.0
        %612 = vmatpush1.msra.mxu0 %v582
        %613 = vmatprep.subr.mxu0 0.0
        %614 = vmatpush1.msra.mxu0 %v583
        %615 = vmatprep.subr.mxu0 0.0
        %616 = vmatpush1.msra.mxu0 %v584
        %617 = vmatprep.subr.mxu0 0.0
        %618 = vmatpush1.msra.mxu0 %v585
        %619 = vmatprep.subr.mxu0 0.0
        %620 = vmatpush1.msra.mxu0 %v586
        %621 = vmatprep.subr.mxu0 0.0
        %622 = vmatpush1.msra.mxu0 %v587
        %623 = vmatprep.subr.mxu0 0.0
        %624 = vmatpush1.msra.mxu0 %v588
        %625 = vmatprep.subr.mxu0 0.0
        %626 = vmatpush1.msra.mxu0 %v589
        %627 = vmatprep.subr.mxu0 0.0
        %628 = vmatpush1.msra.mxu0 %v590
        %629 = vmatprep.subr.mxu0 0.0
        %630 = vmatpush1.msra.mxu0 %v591
        %631 = vmatprep.subr.mxu0 0.0
        %632 = vmatpush1.msra.mxu0 0.0
        %633 = vmatprep.subr.mxu0 0.0
        %634 = vmatpush1.msra.mxu0 0.0
        %635 = vmatprep.subr.mxu0 0.0
        %636 = vmatpush1.msra.mxu0 0.0
        %637 = vmatprep.subr.mxu0 0.0
        %638 = vmatpush1.msra.mxu0 0.0
        %639 = vmatprep.subr.mxu0 0.0
        %640 = vmatpush1.msra.mxu0 0.0
        %641 = vmatprep.subr.mxu0 0.0
        %642 = vmatpush1.msra.mxu0 0.0
        %643 = vmatprep.subr.mxu0 0.0
        %644 = vmatpush1.msra.mxu0 0.0
        %645 = vmatprep.subr.mxu0 0.0
        %646 = vmatpush1.msra.mxu0 0.0
        %647 = vmatprep.subr.mxu0 0.0
        %648 = vmatpush1.msra.mxu0 0.0
        %649 = vmatprep.subr.mxu0 0.0
        %650 = vmatpush1.msra.mxu0 0.0
        %651 = vmatprep.subr.mxu0 0.0
        %652 = vmatpush1.msra.mxu0 0.0
        %653 = vmatprep.subr.mxu0 0.0
        %654 = vmatpush1.msra.mxu0 0.0
        %655 = vmatprep.subr.mxu0 0.0
        %656 = vmatpush1.msra.mxu0 0.0
        %657 = vmatprep.subr.mxu0 0.0
        %658 = vmatpush1.msra.mxu0 0.0
        %659 = vmatprep.subr.mxu0 0.0
        %660 = vmatpush1.msra.mxu0 0.0
        %661 = vmatprep.subr.mxu0 0.0
        %662 = vmatpush1.msra.mxu0 0.0
        %663 = vmatprep.mubr.f32.mxu0 0.0
        %664 = vmatmul.mubr.f32.gmra.mrb[0].mxu0 %v574
        %v665 = vpop.f32.mrb[0].mxu0
        %v666 = vadd.f32 %v597, %v665
        %v667 = vpop.f32.mrb[0].mxu0
        %668 = vmatprep.mubr.f32.mxu0 0.0
        %669 = vmatmul.mubr.f32.gmra.mrb[0].mxu0 %v575
        %v670 = vpop.f32.mrb[0].mxu0
        %v671 = vadd.f32 %v597, %v670
        %v672 = vpop.f32.mrb[0].mxu0
        %673 = vdwg.mxu0
        %v674 = vld [vmem:[#allocation8] sm:$0xff]
        %v675 = vld [vmem:[#allocation8 + $0x8] sm:$0xff]
        %v676 = vld [vmem:[#allocation8 + $0x10] sm:$0xff]
        %v677 = vld [vmem:[#allocation8 + $0x18] sm:$0xff]
        %v678 = vld [vmem:[#allocation8 + $0x20] sm:$0xff]
        %v679 = vld [vmem:[#allocation8 + $0x28] sm:$0xff]
        %v680 = vld [vmem:[#allocation8 + $0x30] sm:$0xff]
        %v681 = vld [vmem:[#allocation8 + $0x38] sm:$0xff]
        %v682 = vld [vmem:[#allocation8 + $0x40] sm:$0xff]
        %v683 = vld [vmem:[#allocation8 + $0x48] sm:$0xff]
        %v684 = vld [vmem:[#allocation8 + $0x50] sm:$0xff]
        %v685 = vld [vmem:[#allocation8 + $0x58] sm:$0xff]
        %v686 = vld [vmem:[#allocation8 + $0x60] sm:$0xff]
        %v687 = vld [vmem:[#allocation8 + $0x68] sm:$0xff]
        %v688 = vld [vmem:[#allocation8 + $0x70] sm:$0xff]
        %v689 = vld [vmem:[#allocation8 + $0x78] sm:$0xff]
        %v690 = vld [vmem:[%s565] sm:$0x1]
        %v692 = vlaneseq
        %v693 = vshrl.u32 %v692, 7
        %v694 = vsub.s32 0, %v693
        %v695 = vrot.slane %v690, %v694
        %697 = vmatprep.subr.mxu0 0.0
        %698 = vmatpush1.msra.mxu0 %v674
        %699 = vmatprep.subr.mxu0 0.0
        %700 = vmatpush1.msra.mxu0 %v675
        %701 = vmatprep.subr.mxu0 0.0
        %702 = vmatpush1.msra.mxu0 %v676
        %703 = vmatprep.subr.mxu0 0.0
        %704 = vmatpush1.msra.mxu0 %v677
        %705 = vmatprep.subr.mxu0 0.0
        %706 = vmatpush1.msra.mxu0 %v678
        %707 = vmatprep.subr.mxu0 0.0
        %708 = vmatpush1.msra.mxu0 %v679
        %709 = vmatprep.subr.mxu0 0.0
        %710 = vmatpush1.msra.mxu0 %v680
        %711 = vmatprep.subr.mxu0 0.0
        %712 = vmatpush1.msra.mxu0 %v681
        %713 = vmatprep.subr.mxu0 0.0
        %714 = vmatpush1.msra.mxu0 %v682
        %715 = vmatprep.subr.mxu0 0.0
        %716 = vmatpush1.msra.mxu0 %v683
        %717 = vmatprep.subr.mxu0 0.0
        %718 = vmatpush1.msra.mxu0 %v684
        %719 = vmatprep.subr.mxu0 0.0
        %720 = vmatpush1.msra.mxu0 %v685
        %721 = vmatprep.subr.mxu0 0.0
        %722 = vmatpush1.msra.mxu0 %v686
        %723 = vmatprep.subr.mxu0 0.0
        %724 = vmatpush1.msra.mxu0 %v687
        %725 = vmatprep.subr.mxu0 0.0
        %726 = vmatpush1.msra.mxu0 %v688
        %727 = vmatprep.subr.mxu0 0.0
        %728 = vmatpush1.msra.mxu0 %v689
        %729 = vmatprep.subr.mxu0 0.0
        %730 = vmatpush1.msra.mxu0 0.0
        %731 = vmatprep.subr.mxu0 0.0
        %732 = vmatpush1.msra.mxu0 0.0
        %733 = vmatprep.subr.mxu0 0.0
        %734 = vmatpush1.msra.mxu0 0.0
        %735 = vmatprep.subr.mxu0 0.0
        %736 = vmatpush1.msra.mxu0 0.0
        %737 = vmatprep.subr.mxu0 0.0
        %738 = vmatpush1.msra.mxu0 0.0
        %739 = vmatprep.subr.mxu0 0.0
        %740 = vmatpush1.msra.mxu0 0.0
        %741 = vmatprep.subr.mxu0 0.0
        %742 = vmatpush1.msra.mxu0 0.0
        %743 = vmatprep.subr.mxu0 0.0
        %744 = vmatpush1.msra.mxu0 0.0
        %745 = vmatprep.subr.mxu0 0.0
        %746 = vmatpush1.msra.mxu0 0.0
        %747 = vmatprep.subr.mxu0 0.0
        %748 = vmatpush1.msra.mxu0 0.0
        %749 = vmatprep.subr.mxu0 0.0
        %750 = vmatpush1.msra.mxu0 0.0
        %751 = vmatprep.subr.mxu0 0.0
        %752 = vmatpush1.msra.mxu0 0.0
        %753 = vmatprep.subr.mxu0 0.0
        %754 = vmatpush1.msra.mxu0 0.0
        %755 = vmatprep.subr.mxu0 0.0
        %756 = vmatpush1.msra.mxu0 0.0
        %757 = vmatprep.subr.mxu0 0.0
        %758 = vmatpush1.msra.mxu0 0.0
        %759 = vmatprep.subr.mxu0 0.0
        %760 = vmatpush1.msra.mxu0 0.0
        %761 = vmatprep.mubr.f32.mxu0 0.0
        %762 = vmatmul.mubr.f32.gmra.mrb[0].mxu0 %v666
        %v763 = vpop.f32.mrb[0].mxu0
        %v764 = vadd.f32 %v695, %v763
        %v765 = vpop.f32.mrb[0].mxu0
        %766 = vmatprep.mubr.f32.mxu0 0.0
        %767 = vmatmul.mubr.f32.gmra.mrb[0].mxu0 %v671
        %v768 = vpop.f32.mrb[0].mxu0
        %v769 = vadd.f32 %v695, %v768
        %v770 = vpop.f32.mrb[0].mxu0
        %771 = vdwg.mxu0
        %v772 = vmax.f32 %v764, 0.0
        %v773 = vmax.f32 %v769, 0.0
        %v774 = vld [vmem:[#allocation10] sm:$0xff]
        %v775 = vld [vmem:[#allocation10 + $0x8] sm:$0xff]
        %v776 = vld [vmem:[#allocation10 + $0x10] sm:$0xff]
        %v777 = vld [vmem:[#allocation10 + $0x18] sm:$0xff]
        %v778 = vld [vmem:[#allocation10 + $0x20] sm:$0xff]
        %v779 = vld [vmem:[#allocation10 + $0x28] sm:$0xff]
        %v780 = vld [vmem:[#allocation10 + $0x30] sm:$0xff]
        %v781 = vld [vmem:[#allocation10 + $0x38] sm:$0xff]
        %v782 = vld [vmem:[#allocation10 + $0x40] sm:$0xff]
        %v783 = vld [vmem:[#allocation10 + $0x48] sm:$0xff]
        %v784 = vld [vmem:[#allocation10 + $0x50] sm:$0xff]
        %v785 = vld [vmem:[#allocation10 + $0x58] sm:$0xff]
        %v786 = vld [vmem:[#allocation10 + $0x60] sm:$0xff]
        %v787 = vld [vmem:[#allocation10 + $0x68] sm:$0xff]
        %v788 = vld [vmem:[#allocation10 + $0x70] sm:$0xff]
        %v789 = vld [vmem:[#allocation10 + $0x78] sm:$0xff]
        %790 = vmatprep.subr.mxu0 0.0
        %791 = vmatpush1.msra.mxu0 %v774
        %792 = vmatprep.subr.mxu0 0.0
        %793 = vmatpush1.msra.mxu0 %v775
        %794 = vmatprep.subr.mxu0 0.0
        %795 = vmatpush1.msra.mxu0 %v776
        %796 = vmatprep.subr.mxu0 0.0
        %797 = vmatpush1.msra.mxu0 %v777
        %798 = vmatprep.subr.mxu0 0.0
        %799 = vmatpush1.msra.mxu0 %v778
        %800 = vmatprep.subr.mxu0 0.0
        %801 = vmatpush1.msra.mxu0 %v779
        %802 = vmatprep.subr.mxu0 0.0
        %803 = vmatpush1.msra.mxu0 %v780
        %804 = vmatprep.subr.mxu0 0.0
        %805 = vmatpush1.msra.mxu0 %v781
        %806 = vmatprep.subr.mxu0 0.0
        %807 = vmatpush1.msra.mxu0 %v782
        %808 = vmatprep.subr.mxu0 0.0
        %809 = vmatpush1.msra.mxu0 %v783
        %810 = vmatprep.subr.mxu0 0.0
        %811 = vmatpush1.msra.mxu0 %v784
        %812 = vmatprep.subr.mxu0 0.0
        %813 = vmatpush1.msra.mxu0 %v785
        %814 = vmatprep.subr.mxu0 0.0
        %815 = vmatpush1.msra.mxu0 %v786
        %816 = vmatprep.subr.mxu0 0.0
        %817 = vmatpush1.msra.mxu0 %v787
        %818 = vmatprep.subr.mxu0 0.0
        %819 = vmatpush1.msra.mxu0 %v788
        %820 = vmatprep.subr.mxu0 0.0
        %821 = vmatpush1.msra.mxu0 %v789
        %822 = vmatprep.subr.mxu0 0.0
        %823 = vmatpush1.msra.mxu0 0.0
        %824 = vmatprep.subr.mxu0 0.0
        %825 = vmatpush1.msra.mxu0 0.0
        %826 = vmatprep.subr.mxu0 0.0
        %827 = vmatpush1.msra.mxu0 0.0
        %828 = vmatprep.subr.mxu0 0.0
        %829 = vmatpush1.msra.mxu0 0.0
        %830 = vmatprep.subr.mxu0 0.0
        %831 = vmatpush1.msra.mxu0 0.0
        %832 = vmatprep.subr.mxu0 0.0
        %833 = vmatpush1.msra.mxu0 0.0
        %834 = vmatprep.subr.mxu0 0.0
        %835 = vmatpush1.msra.mxu0 0.0
        %836 = vmatprep.subr.mxu0 0.0
        %837 = vmatpush1.msra.mxu0 0.0
        %838 = vmatprep.subr.mxu0 0.0
        %839 = vmatpush1.msra.mxu0 0.0
        %840 = vmatprep.subr.mxu0 0.0
        %841 = vmatpush1.msra.mxu0 0.0
        %842 = vmatprep.subr.mxu0 0.0
        %843 = vmatpush1.msra.mxu0 0.0
        %844 = vmatprep.subr.mxu0 0.0
        %845 = vmatpush1.msra.mxu0 0.0
        %846 = vmatprep.subr.mxu0 0.0
        %847 = vmatpush1.msra.mxu0 0.0
        %848 = vmatprep.subr.mxu0 0.0
        %849 = vmatpush1.msra.mxu0 0.0
        %850 = vmatprep.subr.mxu0 0.0
        %851 = vmatpush1.msra.mxu0 0.0
        %852 = vmatprep.subr.mxu0 0.0
        %853 = vmatpush1.msra.mxu0 0.0
        %854 = vmatprep.mubr.f32.mxu0 0.0
        %855 = vmatmul.mubr.f32.gmra.mrb[0].mxu0 %v772
        %v856 = vpop.f32.mrb[0].mxu0
        %v857 = vadd.f32 0.0, %v856
        %v858 = vpop.f32.mrb[0].mxu0
        %859 = vmatprep.mubr.f32.mxu0 0.0
        %860 = vmatmul.mubr.f32.gmra.mrb[0].mxu0 %v773
        %v861 = vpop.f32.mrb[0].mxu0
        %v862 = vadd.f32 0.0, %v861
        %v863 = vpop.f32.mrb[0].mxu0
        %864 = vdwg.mxu0
        %v865 = vadd.f32 %v666, %v857
        %v866 = vadd.f32 %v671, %v862
        %v867 = vld [vmem:[%s569] sm:$0x1]
        %v869 = vlaneseq
        %v870 = vshrl.u32 %v869, 7
        %v871 = vsub.s32 0, %v870
        %v872 = vrot.slane %v867, %v871
        %v874 = vadd.f32 %v865, %v872
        %v875 = vadd.f32 %v866, %v872
        %s876 = scalar_lea.vmem [#allocation8], 128
        %v877 = vld [vmem:[%s876] sm:$0xff]
        %v878 = vld [vmem:[%s876 + $0x8] sm:$0xff]
        %v879 = vld [vmem:[%s876 + $0x10] sm:$0xff]
        %v880 = vld [vmem:[%s876 + $0x18] sm:$0xff]
        %v881 = vld [vmem:[%s876 + $0x20] sm:$0xff]
        %v882 = vld [vmem:[%s876 + $0x28] sm:$0xff]
        %v883 = vld [vmem:[%s876 + $0x30] sm:$0xff]
        %v884 = vld [vmem:[%s876 + $0x38] sm:$0xff]
        %v885 = vld [vmem:[%s876 + $0x40] sm:$0xff]
        %v886 = vld [vmem:[%s876 + $0x48] sm:$0xff]
        %v887 = vld [vmem:[%s876 + $0x50] sm:$0xff]
        %v888 = vld [vmem:[%s876 + $0x58] sm:$0xff]
        %v889 = vld [vmem:[%s876 + $0x60] sm:$0xff]
        %v890 = vld [vmem:[%s876 + $0x68] sm:$0xff]
        %v891 = vld [vmem:[%s876 + $0x70] sm:$0xff]
        %v892 = vld [vmem:[%s876 + $0x78] sm:$0xff]
        %s893 = scalar_lea.vmem %s565, 1
        %v894 = vld [vmem:[%s893] sm:$0x1]
        %v896 = vlaneseq
        %v897 = vshrl.u32 %v896, 7
        %v898 = vsub.s32 0, %v897
        %v899 = vrot.slane %v894, %v898
        %901 = vmatprep.subr.mxu0 0.0
        %902 = vmatpush1.msra.mxu0 %v877
        %903 = vmatprep.subr.mxu0 0.0
        %904 = vmatpush1.msra.mxu0 %v878
        %905 = vmatprep.subr.mxu0 0.0
        %906 = vmatpush1.msra.mxu0 %v879
        %907 = vmatprep.subr.mxu0 0.0
        %908 = vmatpush1.msra.mxu0 %v880
        %909 = vmatprep.subr.mxu0 0.0
        %910 = vmatpush1.msra.mxu0 %v881
        %911 = vmatprep.subr.mxu0 0.0
        %912 = vmatpush1.msra.mxu0 %v882
        %913 = vmatprep.subr.mxu0 0.0
        %914 = vmatpush1.msra.mxu0 %v883
        %915 = vmatprep.subr.mxu0 0.0
        %916 = vmatpush1.msra.mxu0 %v884
        %917 = vmatprep.subr.mxu0 0.0
        %918 = vmatpush1.msra.mxu0 %v885
        %919 = vmatprep.subr.mxu0 0.0
        %920 = vmatpush1.msra.mxu0 %v886
        %921 = vmatprep.subr.mxu0 0.0
        %922 = vmatpush1.msra.mxu0 %v887
        %923 = vmatprep.subr.mxu0 0.0
        %924 = vmatpush1.msra.mxu0 %v888
        %925 = vmatprep.subr.mxu0 0.0
        %926 = vmatpush1.msra.mxu0 %v889
        %927 = vmatprep.subr.mxu0 0.0
        %928 = vmatpush1.msra.mxu0 %v890
        %929 = vmatprep.subr.mxu0 0.0
        %930 = vmatpush1.msra.mxu0 %v891
        %931 = vmatprep.subr.mxu0 0.0
        %932 = vmatpush1.msra.mxu0 %v892
        %933 = vmatprep.subr.mxu0 0.0
        %934 = vmatpush1.msra.mxu0 0.0
        %935 = vmatprep.subr.mxu0 0.0
        %936 = vmatpush1.msra.mxu0 0.0
        %937 = vmatprep.subr.mxu0 0.0
        %938 = vmatpush1.msra.mxu0 0.0
        %939 = vmatprep.subr.mxu0 0.0
        %940 = vmatpush1.msra.mxu0 0.0
        %941 = vmatprep.subr.mxu0 0.0
        %942 = vmatpush1.msra.mxu0 0.0
        %943 = vmatprep.subr.mxu0 0.0
        %944 = vmatpush1.msra.mxu0 0.0
        %945 = vmatprep.subr.mxu0 0.0
        %946 = vmatpush1.msra.mxu0 0.0
        %947 = vmatprep.subr.mxu0 0.0
        %948 = vmatpush1.msra.mxu0 0.0
        %949 = vmatprep.subr.mxu0 0.0
        %950 = vmatpush1.msra.mxu0 0.0
        %951 = vmatprep.subr.mxu0 0.0
        %952 = vmatpush1.msra.mxu0 0.0
        %953 = vmatprep.subr.mxu0 0.0
        %954 = vmatpush1.msra.mxu0 0.0
        %955 = vmatprep.subr.mxu0 0.0
        %956 = vmatpush1.msra.mxu0 0.0
        %957 = vmatprep.subr.mxu0 0.0
        %958 = vmatpush1.msra.mxu0 0.0
        %959 = vmatprep.subr.mxu0 0.0
        %960 = vmatpush1.msra.mxu0 0.0
        %961 = vmatprep.subr.mxu0 0.0
        %962 = vmatpush1.msra.mxu0 0.0
        %963 = vmatprep.subr.mxu0 0.0
        %964 = vmatpush1.msra.mxu0 0.0
        %965 = vmatprep.mubr.f32.mxu0 0.0
        %966 = vmatmul.mubr.f32.gmra.mrb[0].mxu0 %v874
        %v967 = vpop.f32.mrb[0].mxu0
        %v968 = vadd.f32 %v899, %v967
        %v969 = vpop.f32.mrb[0].mxu0
        %970 = vmatprep.mubr.f32.mxu0 0.0
        %971 = vmatmul.mubr.f32.gmra.mrb[0].mxu0 %v875
        %v972 = vpop.f32.mrb[0].mxu0
        %v973 = vadd.f32 %v899, %v972
        %v974 = vpop.f32.mrb[0].mxu0
        %975 = vdwg.mxu0
        %v976 = vmax.f32 %v968, 0.0
        %v977 = vmax.f32 %v973, 0.0
        %s978 = scalar_lea.vmem [#allocation10], 128
        %v979 = vld [vmem:[%s978] sm:$0xff]
        %v980 = vld [vmem:[%s978 + $0x8] sm:$0xff]
        %v981 = vld [vmem:[%s978 + $0x10] sm:$0xff]
        %v982 = vld [vmem:[%s978 + $0x18] sm:$0xff]
        %v983 = vld [vmem:[%s978 + $0x20] sm:$0xff]
        %v984 = vld [vmem:[%s978 + $0x28] sm:$0xff]
        %v985 = vld [vmem:[%s978 + $0x30] sm:$0xff]
        %v986 = vld [vmem:[%s978 + $0x38] sm:$0xff]
        %v987 = vld [vmem:[%s978 + $0x40] sm:$0xff]
        %v988 = vld [vmem:[%s978 + $0x48] sm:$0xff]
        %v989 = vld [vmem:[%s978 + $0x50] sm:$0xff]
        %v990 = vld [vmem:[%s978 + $0x58] sm:$0xff]
        %v991 = vld [vmem:[%s978 + $0x60] sm:$0xff]
        %v992 = vld [vmem:[%s978 + $0x68] sm:$0xff]
        %v993 = vld [vmem:[%s978 + $0x70] sm:$0xff]
        %v994 = vld [vmem:[%s978 + $0x78] sm:$0xff]
        %995 = vmatprep.subr.mxu0 0.0
        %996 = vmatpush1.msra.mxu0 %v979
        %997 = vmatprep.subr.mxu0 0.0
        %998 = vmatpush1.msra.mxu0 %v980
        %999 = vmatprep.subr.mxu0 0.0
        %1000 = vmatpush1.msra.mxu0 %v981
        %1001 = vmatprep.subr.mxu0 0.0
        %1002 = vmatpush1.msra.mxu0 %v982
        %1003 = vmatprep.subr.mxu0 0.0
        %1004 = vmatpush1.msra.mxu0 %v983
        %1005 = vmatprep.subr.mxu0 0.0
        %1006 = vmatpush1.msra.mxu0 %v984
        %1007 = vmatprep.subr.mxu0 0.0
        %1008 = vmatpush1.msra.mxu0 %v985
        %1009 = vmatprep.subr.mxu0 0.0
        %1010 = vmatpush1.msra.mxu0 %v986
        %1011 = vmatprep.subr.mxu0 0.0
        %1012 = vmatpush1.msra.mxu0 %v987
        %1013 = vmatprep.subr.mxu0 0.0
        %1014 = vmatpush1.msra.mxu0 %v988
        %1015 = vmatprep.subr.mxu0 0.0
        %1016 = vmatpush1.msra.mxu0 %v989
        %1017 = vmatprep.subr.mxu0 0.0
        %1018 = vmatpush1.msra.mxu0 %v990
        %1019 = vmatprep.subr.mxu0 0.0
        %1020 = vmatpush1.msra.mxu0 %v991
        %1021 = vmatprep.subr.mxu0 0.0
        %1022 = vmatpush1.msra.mxu0 %v992
        %1023 = vmatprep.subr.mxu0 0.0
        %1024 = vmatpush1.msra.mxu0 %v993
        %1025 = vmatprep.subr.mxu0 0.0
        %1026 = vmatpush1.msra.mxu0 %v994
        %1027 = vmatprep.subr.mxu0 0.0
        %1028 = vmatpush1.msra.mxu0 0.0
        %1029 = vmatprep.subr.mxu0 0.0
        %1030 = vmatpush1.msra.mxu0 0.0
        %1031 = vmatprep.subr.mxu0 0.0
        %1032 = vmatpush1.msra.mxu0 0.0
        %1033 = vmatprep.subr.mxu0 0.0
        %1034 = vmatpush1.msra.mxu0 0.0
        %1035 = vmatprep.subr.mxu0 0.0
        %1036 = vmatpush1.msra.mxu0 0.0
        %1037 = vmatprep.subr.mxu0 0.0
        %1038 = vmatpush1.msra.mxu0 0.0
        %1039 = vmatprep.subr.mxu0 0.0
        %1040 = vmatpush1.msra.mxu0 0.0
        %1041 = vmatprep.subr.mxu0 0.0
        %1042 = vmatpush1.msra.mxu0 0.0
        %1043 = vmatprep.subr.mxu0 0.0
        %1044 = vmatpush1.msra.mxu0 0.0
        %1045 = vmatprep.subr.mxu0 0.0
        %1046 = vmatpush1.msra.mxu0 0.0
        %1047 = vmatprep.subr.mxu0 0.0
        %1048 = vmatpush1.msra.mxu0 0.0
        %1049 = vmatprep.subr.mxu0 0.0
        %1050 = vmatpush1.msra.mxu0 0.0
        %1051 = vmatprep.subr.mxu0 0.0
        %1052 = vmatpush1.msra.mxu0 0.0
        %1053 = vmatprep.subr.mxu0 0.0
        %1054 = vmatpush1.msra.mxu0 0.0
        %1055 = vmatprep.subr.mxu0 0.0
        %1056 = vmatpush1.msra.mxu0 0.0
        %1057 = vmatprep.subr.mxu0 0.0
        %1058 = vmatpush1.msra.mxu0 0.0
        %1059 = vmatprep.mubr.f32.mxu0 0.0
        %1060 = vmatmul.mubr.f32.gmra.mrb[0].mxu0 %v976
        %v1061 = vpop.f32.mrb[0].mxu0
        %v1062 = vadd.f32 0.0, %v1061
        %v1063 = vpop.f32.mrb[0].mxu0
        %1064 = vmatprep.mubr.f32.mxu0 0.0
        %1065 = vmatmul.mubr.f32.gmra.mrb[0].mxu0 %v977
        %v1066 = vpop.f32.mrb[0].mxu0
        %v1067 = vadd.f32 0.0, %v1066
        %v1068 = vpop.f32.mrb[0].mxu0
        %1069 = vdwg.mxu0
        %v1070 = vadd.f32 %v874, %v1062
        %v1071 = vadd.f32 %v875, %v1067
        %s1072 = scalar_lea.vmem %s569, 1
        %v1073 = vld [vmem:[%s1072] sm:$0x1]
        %v1075 = vlaneseq
        %v1076 = vshrl.u32 %v1075, 7
        %v1077 = vsub.s32 0, %v1076
        %v1078 = vrot.slane %v1073, %v1077
        %v1080 = vadd.f32 %v1070, %v1078
        %v1081 = vadd.f32 %v1071, %v1078
        %v1082 = vld [vmem:[#allocation11] sm:$0xff]
        %v1083 = vld [vmem:[#allocation11 + $0x8] sm:$0xff]
        %v1084 = vld [vmem:[#allocation11 + $0x10] sm:$0xff]
        %v1085 = vld [vmem:[#allocation11 + $0x18] sm:$0xff]
        %v1086 = vld [vmem:[#allocation11 + $0x20] sm:$0xff]
        %v1087 = vld [vmem:[#allocation11 + $0x28] sm:$0xff]
        %v1088 = vld [vmem:[#allocation11 + $0x30] sm:$0xff]
        %v1089 = vld [vmem:[#allocation11 + $0x38] sm:$0xff]
        %v1090 = vld [vmem:[#allocation11 + $0x40] sm:$0xff]
        %v1091 = vld [vmem:[#allocation11 + $0x48] sm:$0xff]
        %v1092 = vld [vmem:[#allocation11 + $0x50] sm:$0xff]
        %v1093 = vld [vmem:[#allocation11 + $0x58] sm:$0xff]
        %v1094 = vld [vmem:[#allocation11 + $0x60] sm:$0xff]
        %v1095 = vld [vmem:[#allocation11 + $0x68] sm:$0xff]
        %v1096 = vld [vmem:[#allocation11 + $0x70] sm:$0xff]
        %v1097 = vld [vmem:[#allocation11 + $0x78] sm:$0xff]
        %v1098 = vld [vmem:[%s572] sm:$0x1]
        %v1100 = vlaneseq
        %v1101 = vshrl.u32 %v1100, 7
        %v1102 = vsub.s32 0, %v1101
        %v1103 = vrot.slane %v1098, %v1102
        %1105 = vmatprep.subr.mxu0 0.0
        %1106 = vmatpush1.msra.mxu0 %v1082
        %1107 = vmatprep.subr.mxu0 0.0
        %1108 = vmatpush1.msra.mxu0 %v1083
        %1109 = vmatprep.subr.mxu0 0.0
        %1110 = vmatpush1.msra.mxu0 %v1084
        %1111 = vmatprep.subr.mxu0 0.0
        %1112 = vmatpush1.msra.mxu0 %v1085
        %1113 = vmatprep.subr.mxu0 0.0
        %1114 = vmatpush1.msra.mxu0 %v1086
        %1115 = vmatprep.subr.mxu0 0.0
        %1116 = vmatpush1.msra.mxu0 %v1087
        %1117 = vmatprep.subr.mxu0 0.0
        %1118 = vmatpush1.msra.mxu0 %v1088
        %1119 = vmatprep.subr.mxu0 0.0
        %1120 = vmatpush1.msra.mxu0 %v1089
        %1121 = vmatprep.subr.mxu0 0.0
        %1122 = vmatpush1.msra.mxu0 %v1090
        %1123 = vmatprep.subr.mxu0 0.0
        %1124 = vmatpush1.msra.mxu0 %v1091
        %1125 = vmatprep.subr.mxu0 0.0
        %1126 = vmatpush1.msra.mxu0 %v1092
        %1127 = vmatprep.subr.mxu0 0.0
        %1128 = vmatpush1.msra.mxu0 %v1093
        %1129 = vmatprep.subr.mxu0 0.0
        %1130 = vmatpush1.msra.mxu0 %v1094
        %1131 = vmatprep.subr.mxu0 0.0
        %1132 = vmatpush1.msra.mxu0 %v1095
        %1133 = vmatprep.subr.mxu0 0.0
        %1134 = vmatpush1.msra.mxu0 %v1096
        %1135 = vmatprep.subr.mxu0 0.0
        %1136 = vmatpush1.msra.mxu0 %v1097
        %1137 = vmatprep.subr.mxu0 0.0
        %1138 = vmatpush1.msra.mxu0 0.0
        %1139 = vmatprep.subr.mxu0 0.0
        %1140 = vmatpush1.msra.mxu0 0.0
        %1141 = vmatprep.subr.mxu0 0.0
        %1142 = vmatpush1.msra.mxu0 0.0
        %1143 = vmatprep.subr.mxu0 0.0
        %1144 = vmatpush1.msra.mxu0 0.0
        %1145 = vmatprep.subr.mxu0 0.0
        %1146 = vmatpush1.msra.mxu0 0.0
        %1147 = vmatprep.subr.mxu0 0.0
        %1148 = vmatpush1.msra.mxu0 0.0
        %1149 = vmatprep.subr.mxu0 0.0
        %1150 = vmatpush1.msra.mxu0 0.0
        %1151 = vmatprep.subr.mxu0 0.0
        %1152 = vmatpush1.msra.mxu0 0.0
        %1153 = vmatprep.subr.mxu0 0.0
        %1154 = vmatpush1.msra.mxu0 0.0
        %1155 = vmatprep.subr.mxu0 0.0
        %1156 = vmatpush1.msra.mxu0 0.0
        %1157 = vmatprep.subr.mxu0 0.0
        %1158 = vmatpush1.msra.mxu0 0.0
        %1159 = vmatprep.subr.mxu0 0.0
        %1160 = vmatpush1.msra.mxu0 0.0
        %1161 = vmatprep.subr.mxu0 0.0
        %1162 = vmatpush1.msra.mxu0 0.0
        %1163 = vmatprep.subr.mxu0 0.0
        %1164 = vmatpush1.msra.mxu0 0.0
        %1165 = vmatprep.subr.mxu0 0.0
        %1166 = vmatpush1.msra.mxu0 0.0
        %1167 = vmatprep.subr.mxu0 0.0
        %1168 = vmatpush1.msra.mxu0 0.0
        %1169 = vmatprep.mubr.f32.mxu0 0.0
        %1170 = vmatmul.mubr.f32.gmra.mrb[0].mxu0 %v1080
        %v1171 = vpop.f32.mrb[0].mxu0
        %v1172 = vadd.f32 %v1103, %v1171
        %v1173 = vpop.f32.mrb[0].mxu0
        %1174 = vmatprep.mubr.f32.mxu0 0.0
        %1175 = vmatmul.mubr.f32.gmra.mrb[0].mxu0 %v1081
        %v1176 = vpop.f32.mrb[0].mxu0
        %v1177 = vadd.f32 %v1103, %v1176
        %v1178 = vpop.f32.mrb[0].mxu0
        %1179 = vdwg.mxu0
        %v1180 = vld [vmem:[%s490] sm:$0xff]
        %v1181 = vld [vmem:[%s490 + $0x8] sm:$0xff]
        %1183 = vset.pattern.permute.xlu0 0
        %1184 = vperm.xlu0 %1183, %v1180
        %v1185 = vpop.permute.xlu0 %1184
        %1188 = vset.pattern.permute.xlu0 0
        %1189 = vperm.xlu0 %1188, %v1181
        %v1190 = vpop.permute.xlu0 %1189
        %v1192 = vlaneseq
        %v1193 = vshrl.u32 %v1192, 7
        %v1194 = vsub.s32 0, %v1193
        %v1195 = vrot.slane %v1172, %v1194
        %v1196 = vlaneseq
        %v1197 = vshrl.u32 %v1196, 7
        %v1198 = vsub.s32 0, %v1197
        %v1199 = vrot.slane %v1177, %v1198
        %v1200 = vmul.f32 %v1185, %v1195
        %v1201 = vmul.f32 %v1190, %v1199
        %1202 = vset.pattern.permute.xlu0 1
        %1203 = vperm.xlu0 %1202, %v1180
        %v1204 = vpop.permute.xlu0 %1203
        %1206 = vset.pattern.permute.xlu0 1
        %1207 = vperm.xlu0 %1206, %v1181
        %v1208 = vpop.permute.xlu0 %1207
        %v1210 = vlaneseq
        %v1211 = vshrl.u32 %v1210, 7
        %v1212 = vsub.s32 1, %v1211
        %v1213 = vrot.slane %v1172, %v1212
        %v1214 = vlaneseq
        %v1215 = vshrl.u32 %v1214, 7
        %v1216 = vsub.s32 1, %v1215
        %v1217 = vrot.slane %v1177, %v1216
        %v1218 = vmul.f32 %v1204, %v1213
        %v1219 = vmul.f32 %v1208, %v1217
        %v1220 = vadd.f32 %v1200, %v1218
        %v1221 = vadd.f32 %v1201, %v1219
        %1222 = vset.pattern.permute.xlu0 2
        %1223 = vperm.xlu0 %1222, %v1180
        %v1224 = vpop.permute.xlu0 %1223
        %1226 = vset.pattern.permute.xlu0 2
        %1227 = vperm.xlu0 %1226, %v1181
        %v1228 = vpop.permute.xlu0 %1227
        %v1230 = vlaneseq
        %v1231 = vshrl.u32 %v1230, 7
        %v1232 = vsub.s32 2, %v1231
        %v1233 = vrot.slane %v1172, %v1232
        %v1234 = vlaneseq
        %v1235 = vshrl.u32 %v1234, 7
        %v1236 = vsub.s32 2, %v1235
        %v1237 = vrot.slane %v1177, %v1236
        %v1238 = vmul.f32 %v1224, %v1233
        %v1239 = vmul.f32 %v1228, %v1237
        %v1240 = vadd.f32 %v1220, %v1238
        %v1241 = vadd.f32 %v1221, %v1239
        %1242 = vset.pattern.permute.xlu0 3
        %1243 = vperm.xlu0 %1242, %v1180
        %v1244 = vpop.permute.xlu0 %1243
        %1246 = vset.pattern.permute.xlu0 3
        %1247 = vperm.xlu0 %1246, %v1181
        %v1248 = vpop.permute.xlu0 %1247
        %v1250 = vlaneseq
        %v1251 = vshrl.u32 %v1250, 7
        %v1252 = vsub.s32 3, %v1251
        %v1253 = vrot.slane %v1172, %v1252
        %v1254 = vlaneseq
        %v1255 = vshrl.u32 %v1254, 7
        %v1256 = vsub.s32 3, %v1255
        %v1257 = vrot.slane %v1177, %v1256
        %v1258 = vmul.f32 %v1244, %v1253
        %v1259 = vmul.f32 %v1248, %v1257
        %v1260 = vadd.f32 %v1240, %v1258
        %v1261 = vadd.f32 %v1241, %v1259
        %1262 = vset.pattern.permute.xlu0 4
        %1263 = vperm.xlu0 %1262, %v1180
        %v1264 = vpop.permute.xlu0 %1263
        %1266 = vset.pattern.permute.xlu0 4
        %1267 = vperm.xlu0 %1266, %v1181
        %v1268 = vpop.permute.xlu0 %1267
        %v1270 = vlaneseq
        %v1271 = vshrl.u32 %v1270, 7
        %v1272 = vsub.s32 4, %v1271
        %v1273 = vrot.slane %v1172, %v1272
        %v1274 = vlaneseq
        %v1275 = vshrl.u32 %v1274, 7
        %v1276 = vsub.s32 4, %v1275
        %v1277 = vrot.slane %v1177, %v1276
        %v1278 = vmul.f32 %v1264, %v1273
        %v1279 = vmul.f32 %v1268, %v1277
        %v1280 = vadd.f32 %v1260, %v1278
        %v1281 = vadd.f32 %v1261, %v1279
        %1282 = vset.pattern.permute.xlu0 5
        %1283 = vperm.xlu0 %1282, %v1180
        %v1284 = vpop.permute.xlu0 %1283
        %1286 = vset.pattern.permute.xlu0 5
        %1287 = vperm.xlu0 %1286, %v1181
        %v1288 = vpop.permute.xlu0 %1287
        %v1290 = vlaneseq
        %v1291 = vshrl.u32 %v1290, 7
        %v1292 = vsub.s32 5, %v1291
        %v1293 = vrot.slane %v1172, %v1292
        %v1294 = vlaneseq
        %v1295 = vshrl.u32 %v1294, 7
        %v1296 = vsub.s32 5, %v1295
        %v1297 = vrot.slane %v1177, %v1296
        %v1298 = vmul.f32 %v1284, %v1293
        %v1299 = vmul.f32 %v1288, %v1297
        %v1300 = vadd.f32 %v1280, %v1298
        %v1301 = vadd.f32 %v1281, %v1299
        %1302 = vset.pattern.permute.xlu0 6
        %1303 = vperm.xlu0 %1302, %v1180
        %v1304 = vpop.permute.xlu0 %1303
        %1306 = vset.pattern.permute.xlu0 6
        %1307 = vperm.xlu0 %1306, %v1181
        %v1308 = vpop.permute.xlu0 %1307
        %v1310 = vlaneseq
        %v1311 = vshrl.u32 %v1310, 7
        %v1312 = vsub.s32 6, %v1311
        %v1313 = vrot.slane %v1172, %v1312
        %v1314 = vlaneseq
        %v1315 = vshrl.u32 %v1314, 7
        %v1316 = vsub.s32 6, %v1315
        %v1317 = vrot.slane %v1177, %v1316
        %v1318 = vmul.f32 %v1304, %v1313
        %v1319 = vmul.f32 %v1308, %v1317
        %v1320 = vadd.f32 %v1300, %v1318
        %v1321 = vadd.f32 %v1301, %v1319
        %1322 = vset.pattern.permute.xlu0 7
        %1323 = vperm.xlu0 %1322, %v1180
        %v1324 = vpop.permute.xlu0 %1323
        %1326 = vset.pattern.permute.xlu0 7
        %1327 = vperm.xlu0 %1326, %v1181
        %v1328 = vpop.permute.xlu0 %1327
        %v1330 = vlaneseq
        %v1331 = vshrl.u32 %v1330, 7
        %v1332 = vsub.s32 7, %v1331
        %v1333 = vrot.slane %v1172, %v1332
        %v1334 = vlaneseq
        %v1335 = vshrl.u32 %v1334, 7
        %v1336 = vsub.s32 7, %v1335
        %v1337 = vrot.slane %v1177, %v1336
        %v1338 = vmul.f32 %v1324, %v1333
        %v1339 = vmul.f32 %v1328, %v1337
        %v1340 = vadd.f32 %v1320, %v1338
        %v1341 = vadd.f32 %v1321, %v1339
        %v1342 = vmax.f32 %v1340, 0.0
        %v1343 = vmax.f32 %v1341, 0.0
        %1344 = vst [vmem:[%s556] sm:$0xff] %v1342
        %1345 = vst [vmem:[%s556 + $0x8] sm:$0xff] %v1343
        %s1346 = sand.u32 %s314, 1
        %s1347 = scalar_lea.sflag [#allocation4], %s1346
        %s1348 = sand.u32 %s314, 1
        %s1349 = smul.addr %s1348, 16
        %s1350 = scalar_lea.vmem [#allocation13], %s1349
        // Predicated region
        $region85: #{tpu_custom_call.1} parent=59 // pred_check
          %p1351 = pneg %p324
        $region86: #{tpu_custom_call.1} parent=59 // pred_check_branch
          %1353 = sbr.rel (%p1351) target = $region88
        $region87: #{tpu_custom_call.1} parent=59 // pred_region
          %s1354 = smul.u32 2, %s35
          %s1356 = ssub.s32 256, 256
          %1357 = vsyncadd %s1347, %s1356
          %s1358 = smul.addr %s1354, 2
          %s1359 = sadd.s32 %s34, %s1358
          %s1360 = smul.addr %s1359, 128
          %s1361 = scalar_lea.hbm %s10, %s1360
          %s1362 = sshll.u32 %s1350, 4
          %s1363 = int_to_ptr.vmem [resolvable:$true] %s1362
          %1368 = dma.vmem_to_hbm [thread:$0]  %s1363, 256, %s1361, %s1347, 128, 256, 8
        $region88: #{tpu_custom_call.1} parent=59 // pred_fallthru
          _
      $region60: #{tpu_custom_call.1} parent=5 // pred_fallthru
        _
      %p1369 = scmp.le.s32.totalorder 2, %s25
      // Predicated region
      $region89: #{tpu_custom_call.1} parent=5 // pred_check
        %p1370 = pneg %p1369
      $region90: #{tpu_custom_call.1} parent=5 // pred_check_branch
        %1372 = sbr.rel (%p1370) target = $region92
      $region91: #{tpu_custom_call.1} parent=5 // pred_region
        %s1373 = ssub.s32 %s25, 2
        // Predicated region
        $region93: #{tpu_custom_call.1} parent=91 // pred_check
          %p1374 = pneg %p330
        $region94: #{tpu_custom_call.1} parent=91 // pred_check_branch
          %1376 = sbr.rel (%p1374) target = $region96
        $region95: #{tpu_custom_call.1} parent=91 // pred_region
          %s1377 = sand.u32 %s315, 1
          %s1378 = scalar_lea.sflag [#allocation4], %s1377
          %s1379 = sand.u32 %s315, 1
          %s1380 = smul.addr %s1379, 16
          %s1381 = scalar_lea.vmem [#allocation13], %s1380
          %1382 = dma.done %s1378, 256
        $region96: #{tpu_custom_call.1} parent=91 // pred_fallthru
          _
      $region92: #{tpu_custom_call.1} parent=5 // pred_fallthru
        _
    $region6: #{tpu_custom_call.1} parent=1 // loop_footer
      %s29 = sadd.s32 1, %s25
    $region7: #{tpu_custom_call.1} parent=1 // loop_footer_branch
      %24 = sbr.rel target = $region3
    $region8: #{tpu_custom_call.1} parent=1 // loop_exit
      _
    %1383 = vsyncpa [#allocation3], 1
    %s1384 = scalar_lea.sflag [#allocation3], 1
    %1385 = vsyncpa %s1384, 1
    %1386 = vsyncpa [#allocation6], 1
    %s1387 = scalar_lea.sflag [#allocation6], 1
    %1388 = vsyncpa %s1387, 1
    %1389 = vsyncpa [#allocation9], 1
    %1390 = vsyncpa [#allocation12], 1
    %1391 = vsyncpa [#allocation4], 1
    %s1392 = scalar_lea.sflag [#allocation4], 1
    %1393 = vsyncpa %s1392, 1

</llo_original>
